<compile_context>
chip_gen: v7x
topology: tpu7x:2x2x1
jax: 0.10.0
libtpu: 0.0.40
codegen_flags: <defaults>
</compile_context>

<pallas_src>
import functools

import jax
import jax.numpy as jnp
from jax.experimental import pallas as pl
from jax.experimental.pallas import tpu as pltpu


def _multi_linear_kernel(f_ref, g_ref, o_ref, *, num_c: int):
    # f_ref: (TB, F)   g_ref: (TB, C)   o_ref: (TB, C*F)
    f = f_ref[...]                      # (TB, F), batch on sublanes, F on lanes
    g = g_ref[...]                      # (TB, C)
    # out[:, c*F + j] = g[:, c] * f[:, j]
    # Each piece is a cheap lane-broadcast multiply; the lane-concatenate builds
    # the lane-dense flat row so the store is full-width (C*F lanes).
    pieces = [g[:, c:c + 1] * f for c in range(num_c)]      # C x (TB, F)
    o_ref[...] = jnp.concatenate(pieces, axis=1).astype(o_ref.dtype)


def _pick_block_b(batch: int, c: int, f: int, itemsize: int) -> int:
    """Largest batch tile with ~2 MiB of output per block (v7x-safe when
    double-buffered), rounded to a multiple of 8 sublanes."""
    target_bytes = 2 * 1024 * 1024
    tb = max(8, target_bytes // max(1, c * f * itemsize))
    tb = min(tb, 1024)
    tb = (tb // 8) * 8
    if tb >= batch:
        return batch                    # single block == full dim (always legal)
    return tb


def multi_linear_map(f: jax.Array, g: jax.Array) -> jax.Array:
    """Pallas implementation of MultiLinearMap.forward: (B,F),(B,C) -> (B, C*F)."""
    assert f.ndim == 2 and g.ndim == 2
    B, F = f.shape
    B2, C = g.shape
    assert B == B2, "batch dims must match"

    out_dtype = jnp.promote_types(f.dtype, g.dtype)
    TB = _pick_block_b(B, C, F, jnp.dtype(out_dtype).itemsize)
    grid = (pl.cdiv(B, TB),)

    kernel = functools.partial(_multi_linear_kernel, num_c=C)

    return pl.pallas_call(
        kernel,
        out_shape=jax.ShapeDtypeStruct((B, C * F), out_dtype),
        grid_spec=pltpu.PrefetchScalarGridSpec(
            num_scalar_prefetch=0,
            grid=grid,
            in_specs=[
                pl.BlockSpec((TB, F), lambda i: (i, 0)),
                pl.BlockSpec((TB, C), lambda i: (i, 0)),
            ],
            out_specs=pl.BlockSpec((TB, C * F), lambda i: (i, 0)),
        ),
        compiler_params=pltpu.CompilerParams(
            # Batch tiles are independent -> allow megacore sharding (v7x: 2 TCs).
            dimension_semantics=("parallel",),
        ),
    )(f, g)


if __name__ == "__main__":
    key = jax.random.PRNGKey(0)
    kf, kg = jax.random.split(key)

    # Small but kernel-exercising shapes consistent with the module:
    # f = features (B, F), g = class scores (B, C). F multiple of 128 keeps the
    # lane-concatenate fully aligned (unmasked stores).
    B, F, C = 1024, 128, 8
    f = jax.random.normal(kf, (B, F), dtype=jnp.float32)
    g = jax.random.normal(kg, (B, C), dtype=jnp.float32)

    out = jax.block_until_ready(multi_linear_map(f, g))

    # Reference: same semantics as torch.bmm(g.unsqueeze(2), f.unsqueeze(1)).view(B, -1)
    ref = (g[:, :, None] * f[:, None, :]).reshape(B, C * F)
    assert out.shape == (B, C * F)
    assert jnp.allclose(out, ref, atol=1e-6, rtol=1e-6)

    print("KERNEL_OK")
</pallas_src>

<mosaic_0001>
module attributes {stable_mosaic.version = 11 : i64} {
  func.func @_multi_linear_kernel(%arg0: i32, %arg1: memref<512x128xf32, #tpu.memory_space<vmem>>, %arg2: memref<512x8xf32, #tpu.memory_space<vmem>>, %arg3: memref<512x1024xf32, #tpu.memory_space<vmem>>) attributes {dimension_semantics = [#tpu.dimension_semantics<parallel>], iteration_bounds = array<i64: 2>, scalar_prefetch = 0 : i64, scratch_operands = 0 : i64, tpu.core_type = #tpu.core_type<tc>, window_params = [{transform_indices = @transform_0, window_bounds = array<i64: 512, 128>}, {transform_indices = @transform_1, window_bounds = array<i64: 512, 8>}, {transform_indices = @transform_2, window_bounds = array<i64: 512, 1024>}]} {
    %c0 = arith.constant 0 : index
    %c0_0 = arith.constant 0 : index
    %0 = vector.load %arg1[%c0, %c0_0] : memref<512x128xf32, #tpu.memory_space<vmem>>, vector<512x128xf32>
    %c0_1 = arith.constant 0 : index
    %c0_2 = arith.constant 0 : index
    %1 = vector.load %arg2[%c0_1, %c0_2] : memref<512x8xf32, #tpu.memory_space<vmem>>, vector<512x8xf32>
    %2 = vector.extract_strided_slice %1 {offsets = [0, 0], sizes = [512, 1], strides = [1, 1]} : vector<512x8xf32> to vector<512x1xf32>
    %3 = vector.broadcast %2 : vector<512x1xf32> to vector<512x128xf32>
    %4 = arith.mulf %3, %0 : vector<512x128xf32>
    %5 = vector.extract_strided_slice %1 {offsets = [0, 1], sizes = [512, 1], strides = [1, 1]} : vector<512x8xf32> to vector<512x1xf32>
    %6 = vector.broadcast %5 : vector<512x1xf32> to vector<512x128xf32>
    %7 = arith.mulf %6, %0 : vector<512x128xf32>
    %8 = vector.extract_strided_slice %1 {offsets = [0, 2], sizes = [512, 1], strides = [1, 1]} : vector<512x8xf32> to vector<512x1xf32>
    %9 = vector.broadcast %8 : vector<512x1xf32> to vector<512x128xf32>
    %10 = arith.mulf %9, %0 : vector<512x128xf32>
    %11 = vector.extract_strided_slice %1 {offsets = [0, 3], sizes = [512, 1], strides = [1, 1]} : vector<512x8xf32> to vector<512x1xf32>
    %12 = vector.broadcast %11 : vector<512x1xf32> to vector<512x128xf32>
    %13 = arith.mulf %12, %0 : vector<512x128xf32>
    %14 = vector.extract_strided_slice %1 {offsets = [0, 4], sizes = [512, 1], strides = [1, 1]} : vector<512x8xf32> to vector<512x1xf32>
    %15 = vector.broadcast %14 : vector<512x1xf32> to vector<512x128xf32>
    %16 = arith.mulf %15, %0 : vector<512x128xf32>
    %17 = vector.extract_strided_slice %1 {offsets = [0, 5], sizes = [512, 1], strides = [1, 1]} : vector<512x8xf32> to vector<512x1xf32>
    %18 = vector.broadcast %17 : vector<512x1xf32> to vector<512x128xf32>
    %19 = arith.mulf %18, %0 : vector<512x128xf32>
    %20 = vector.extract_strided_slice %1 {offsets = [0, 6], sizes = [512, 1], strides = [1, 1]} : vector<512x8xf32> to vector<512x1xf32>
    %21 = vector.broadcast %20 : vector<512x1xf32> to vector<512x128xf32>
    %22 = arith.mulf %21, %0 : vector<512x128xf32>
    %23 = vector.extract_strided_slice %1 {offsets = [0, 7], sizes = [512, 1], strides = [1, 1]} : vector<512x8xf32> to vector<512x1xf32>
    %24 = vector.broadcast %23 : vector<512x1xf32> to vector<512x128xf32>
    %25 = arith.mulf %24, %0 : vector<512x128xf32>
    %26 = tpu.concatenate %4, %7, %10, %13, %16, %19, %22, %25 in 1 : vector<512x128xf32>, vector<512x128xf32>, vector<512x128xf32>, vector<512x128xf32>, vector<512x128xf32>, vector<512x128xf32>, vector<512x128xf32>, vector<512x128xf32> -> vector<512x1024xf32>
    %c0_3 = arith.constant 0 : index
    %c0_4 = arith.constant 0 : index
    %27 = vector.load %arg3[%c0_3, %c0_4] : memref<512x1024xf32, #tpu.memory_space<vmem>>, vector<512x1024xf32>
    tpu.vector_store %arg3[%c0_3, %c0_4], %26 {strides = array<i32>} : memref<512x1024xf32, #tpu.memory_space<vmem>>, vector<512x1024xf32>,
    return
  }
  func.func @transform_0(%arg0: i32) -> (i32, i32) {
    %c0_i32 = arith.constant 0 : i32
    %c0_i32_0 = arith.constant 0 : i32
    return %arg0, %c0_i32 : i32, i32
  }
  func.func @transform_1(%arg0: i32) -> (i32, i32) {
    %c0_i32 = arith.constant 0 : i32
    %c0_i32_0 = arith.constant 0 : i32
    return %arg0, %c0_i32 : i32, i32
  }
  func.func @transform_2(%arg0: i32) -> (i32, i32) {
    %c0_i32 = arith.constant 0 : i32
    %c0_i32_0 = arith.constant 0 : i32
    return %arg0, %c0_i32 : i32, i32
  }
}

</mosaic_0001>

<llo_original>
// kernel: tpu_custom_call.1
$region0: #{tpu_custom_call.1}
  #allocation0 [shape = 'u32[]', space=smem, size = 0x4, offset = 0x4, fixed_abs, tag = 'smem constant byte address 0x4 - core index']
  #allocation1 [shape = 'u32[144,128]{1,0:T(1,128)}', space=vmem, size = 0x12000, scoped, tag = 'internal scratch']
  %s0 = inlined_call_operand.hbm [shape: f32[1024,128], index: 0, kind: input, shape index: {}]
  %s1 = inlined_call_operand.vmem [shape: f32[1024,8], index: 1, kind: input, shape index: {}]
  %s2 = inlined_call_operand.hbm [shape: f32[1024,1024], index: 2, kind: output, shape index: {}]
  %s3 = sld [smem:[#allocation0]]
  $region45: #{tpu_custom_call.1} parent=0
    _
  %s5 = ssub.s32 1, %s3
  %s6 = scalar_select 0, %s5, %s3
  $region1: #{tpu_custom_call.1} parent=0
    #allocation2 [shape = 'u8[524288]{0}', space=vmem, size = 0x80000, scoped, tag = 'input window, operand 0']
    #allocation3 [shape = 's32[2]{0}', space=sflag, size = 0x8, scoped, tag = 'scoped memory for tpu_custom_call.1']
    #allocation4 [shape = 's32[2]{0}', space=sflag, size = 0x8, scoped, tag = 'scoped memory for tpu_custom_call.1']
    #allocation5 [shape = 'u8[4194304]{0}', space=vmem, size = 0x400000, scoped, tag = 'output window, operand 0']
    %7 = vsyncpa [#allocation3], 0
    %s8 = scalar_lea.sflag [#allocation3], 1
    %9 = vsyncpa %s8, 0
    %10 = vsyncpa [#allocation4], 0
    %s11 = scalar_lea.sflag [#allocation4], 1
    %12 = vsyncpa %s11, 0
    loop: start=0, step=1, limit=4
    $region2: #{tpu_custom_call.1} parent=1 // loop_pre_header
      _
    $region3: #{tpu_custom_call.1} parent=1 // loop_header
      %s14 = sphi 0, %s18
      %p15 = scmp.ge.s32.totalorder %s14, 4
      %s24 = sphi 0, %s26
      %s27 = sphi 0, %s24
      %s28 = sphi 0, %s27
      %s44 = sphi 0, %s28
      %s50 = sphi 0, %s52
      %s53 = sphi 0, %s50
      %s54 = sphi 0, %s53
      %s70 = sphi 0, %s54
      %s76 = sphi 0, %s78
      %s79 = sphi 0, %s76
      %s80 = sphi 0, %s79
      %s96 = sphi 0, %s80
    $region4: #{tpu_custom_call.1} parent=1 // loop_header_branch
      %17 = sbr.rel (%p15) target = $region8
    $region5: #{tpu_custom_call.1} parent=1 // loop_body
      %s19 = ssub.s32 %s14, 1
      %s20 = ssub.s32 %s14, 2
      %s21 = sadd.s32 %s14, 1
      %s22 = ssub.s32 %s14, %s21
      %p23 = scmp.eq.s32.totalorder %s22, 0
      %s25 = sadd.s32 %s24, 1
      %s26 = scalar_select %p23, %s24, %s25
      %p29 = pneg %p23
      %p30 = scmp.eq.s32.totalorder %s14, 1
      %p31 = por %p29, %p30
      %p32 = scmp.ne.s32.totalorder %s24, %s27
      %p33 = scmp.eq.s32.totalorder %s14, 0
      %p34 = por %p32, %p33
      %p35 = scmp.ne.s32.totalorder %s24, %s27
      %p36 = scmp.eq.s32.totalorder %s19, 1
      %p37 = por %p35, %p36
      %p38 = scmp.ne.s32.totalorder %s27, %s28
      %p39 = scmp.eq.s32.totalorder %s19, 0
      %p40 = por %p38, %p39
      %p41 = scmp.ne.s32.totalorder %s27, %s28
      %p42 = scmp.eq.s32.totalorder %s20, 1
      %p43 = por %p41, %p42
      %p45 = scmp.ne.s32.totalorder %s28, %s44
      %p46 = scmp.eq.s32.totalorder %s20, 0
      %p47 = por %p45, %p46
      %s48 = ssub.s32 %s14, %s21
      %p49 = scmp.eq.s32.totalorder %s48, 0
      %s51 = sadd.s32 %s50, 1
      %s52 = scalar_select %p49, %s50, %s51
      %p55 = pneg %p49
      %p56 = scmp.eq.s32.totalorder %s14, 1
      %p57 = por %p55, %p56
      %p58 = scmp.ne.s32.totalorder %s50, %s53
      %p59 = scmp.eq.s32.totalorder %s14, 0
      %p60 = por %p58, %p59
      %p61 = scmp.ne.s32.totalorder %s50, %s53
      %p62 = scmp.eq.s32.totalorder %s19, 1
      %p63 = por %p61, %p62
      %p64 = scmp.ne.s32.totalorder %s53, %s54
      %p65 = scmp.eq.s32.totalorder %s19, 0
      %p66 = por %p64, %p65
      %p67 = scmp.ne.s32.totalorder %s53, %s54
      %p68 = scmp.eq.s32.totalorder %s20, 1
      %p69 = por %p67, %p68
      %p71 = scmp.ne.s32.totalorder %s54, %s70
      %p72 = scmp.eq.s32.totalorder %s20, 0
      %p73 = por %p71, %p72
      %s74 = ssub.s32 %s14, %s21
      %p75 = scmp.eq.s32.totalorder %s74, 0
      %s77 = sadd.s32 %s76, 1
      %s78 = scalar_select %p75, %s76, %s77
      %p81 = pneg %p75
      %p82 = scmp.eq.s32.totalorder %s14, 1
      %p83 = por %p81, %p82
      %p84 = scmp.ne.s32.totalorder %s76, %s79
      %p85 = scmp.eq.s32.totalorder %s14, 0
      %p86 = por %p84, %p85
      %p87 = scmp.ne.s32.totalorder %s76, %s79
      %p88 = scmp.eq.s32.totalorder %s19, 1
      %p89 = por %p87, %p88
      %p90 = scmp.ne.s32.totalorder %s79, %s80
      %p91 = scmp.eq.s32.totalorder %s19, 0
      %p92 = por %p90, %p91
      %p93 = scmp.ne.s32.totalorder %s79, %s80
      %p94 = scmp.eq.s32.totalorder %s20, 1
      %p95 = por %p93, %p94
      %p97 = scmp.ne.s32.totalorder %s80, %s96
      %p98 = scmp.eq.s32.totalorder %s20, 0
      %p99 = por %p97, %p98
      %p100 = scmp.le.s32.totalorder 1, %s14
      %p101 = scmp.lt.s32.totalorder %s14, 3
      %p102 = pnand %p100, %p101
      %p103 = pneg %p102
      // Predicated region
      $region9: #{tpu_custom_call.1} parent=5 // pred_check
        _
      $region10: #{tpu_custom_call.1} parent=5 // pred_check_branch
        %105 = sbr.rel (%p102) target = $region12
      $region11: #{tpu_custom_call.1} parent=5 // pred_region
        %s106 = ssub.s32 %s14, 1
      $region12: #{tpu_custom_call.1} parent=5 // pred_fallthru
        _
      %p107 = scmp.lt.s32.totalorder %s14, 2
      // Predicated region
      $region13: #{tpu_custom_call.1} parent=5 // pred_check
        %p108 = pneg %p107
      $region14: #{tpu_custom_call.1} parent=5 // pred_check_branch
        %110 = sbr.rel (%p108) target = $region16
      $region15: #{tpu_custom_call.1} parent=5 // pred_region
        // Predicated region
        $region17: #{tpu_custom_call.1} parent=15 // pred_check
          %p111 = pneg %p34
        $region18: #{tpu_custom_call.1} parent=15 // pred_check_branch
          %113 = sbr.rel (%p111) target = $region20
        $region19: #{tpu_custom_call.1} parent=15 // pred_region
          %s114 = sand.u32 %s24, 1
          %s115 = scalar_lea.sflag [#allocation3], %s114
          %s116 = sand.u32 %s24, 1
          %s117 = smul.addr %s116, 512
          %s118 = scalar_lea.vmem [#allocation2], %s117
          %s119 = smul.u32 64, %s14
          %s121 = ssub.s32 8192, 8192
          %122 = vsyncadd %s115, %s121
          %s123 = smul.addr %s119, 128
          %s124 = scalar_lea.hbm %s0, %s123
          %s125 = sshll.u32 %s118, 4
          %s126 = int_to_ptr.vmem [resolvable:$true] %s125
          %131 = dma.hbm_to_vmem [thread:$0]  %s124, 8192, %s126, %s115, 128, 128, 8
        $region20: #{tpu_custom_call.1} parent=15 // pred_fallthru
          _
        // Predicated region
        $region21: #{tpu_custom_call.1} parent=15 // pred_check
          %p132 = pneg %p60
        $region22: #{tpu_custom_call.1} parent=15 // pred_check_branch
          %134 = sbr.rel (%p132) target = $region24
        $region23: #{tpu_custom_call.1} parent=15 // pred_region
          %s135 = smul.u32 64, %s14
          %p136 = scmp.lt.s32.totalorder %s135, 127
          %s137 = scalar_select %p136, %s135, 127
          %s138 = smul.addr %s137, 8
          %s139 = scalar_lea.vmem %s1, %s138
          %s140 = smul.u32 64, %s14
        $region24: #{tpu_custom_call.1} parent=15 // pred_fallthru
          _
      $region16: #{tpu_custom_call.1} parent=5 // pred_fallthru
        _
      %p141 = scmp.le.s32.totalorder 1, %s14
      %p142 = scmp.lt.s32.totalorder %s14, 3
      %p143 = pnand %p141, %p142
      %p144 = pneg %p143
      // Predicated region
      $region25: #{tpu_custom_call.1} parent=5 // pred_check
        _
      $region26: #{tpu_custom_call.1} parent=5 // pred_check_branch
        %146 = sbr.rel (%p143) target = $region28
      $region27: #{tpu_custom_call.1} parent=5 // pred_region
        %s147 = ssub.s32 %s14, 1
        %s148 = sand.u32 %s27, 1
        %s149 = scalar_lea.sflag [#allocation3], %s148
        %s150 = sand.u32 %s27, 1
        %s151 = smul.addr %s150, 512
        %s152 = scalar_lea.vmem [#allocation2], %s151
        // Predicated region
        $region29: #{tpu_custom_call.1} parent=27 // pred_check
          %p153 = pneg %p40
        $region30: #{tpu_custom_call.1} parent=27 // pred_check_branch
          %155 = sbr.rel (%p153) target = $region32
        $region31: #{tpu_custom_call.1} parent=27 // pred_region
          %156 = dma.done %s149, 8192
        $region32: #{tpu_custom_call.1} parent=27 // pred_fallthru
          _
        %s157 = sand.u32 %s27, 1
        %s158 = scalar_lea.sflag [#allocation3], %s157
        %s159 = sand.u32 %s27, 1
        %s160 = smul.addr %s159, 512
        %s161 = scalar_lea.vmem [#allocation2], %s160
        %p162 = pneg %p40
        %p163 = pneg %p37
        %s164 = smul.u32 64, %s19
        %p165 = scmp.lt.s32.totalorder %s164, 127
        %s166 = scalar_select %p165, %s164, 127
        %s167 = smul.addr %s166, 8
        %s168 = scalar_lea.vmem %s1, %s167
        %p169 = pneg %p66
        %p170 = pneg %p63
        %p171 = pneg %p92
        %p172 = pneg %p89
        %s173 = sand.u32 %s79, 1
        %s174 = scalar_lea.sflag [#allocation4], %s173
        %s175 = sand.u32 %s79, 1
        %s176 = smul.addr %s175, 4096
        %s177 = scalar_lea.vmem [#allocation5], %s176
        %s178 = smul.u32 64, %s19
        %s179 = smul.u32 64, %s19
        %p180 = scmp.lt.s32.totalorder %s179, 127
        %s181 = scalar_select %p180, %s179, 127
        %s182 = smul.addr %s181, 8
        %s183 = scalar_lea.vmem %s1, %s182
        %s184 = smul.u32 64, %s19
        %s185 = smul.u32 64, %s19
        %v186 = vld [vmem:[%s152] sm:$0xff]
        %v187 = vld [vmem:[%s152 + $0x8] sm:$0xff]
        %v188 = vld [vmem:[%s152 + $0x10] sm:$0xff]
        %v189 = vld [vmem:[%s152 + $0x18] sm:$0xff]
        %v190 = vld [vmem:[%s152 + $0x20] sm:$0xff]
        %v191 = vld [vmem:[%s152 + $0x28] sm:$0xff]
        %v192 = vld [vmem:[%s152 + $0x30] sm:$0xff]
        %v193 = vld [vmem:[%s152 + $0x38] sm:$0xff]
        %v194 = vld [vmem:[%s152 + $0x40] sm:$0xff]
        %v195 = vld [vmem:[%s152 + $0x48] sm:$0xff]
        %v196 = vld [vmem:[%s152 + $0x50] sm:$0xff]
        %v197 = vld [vmem:[%s152 + $0x58] sm:$0xff]
        %v198 = vld [vmem:[%s152 + $0x60] sm:$0xff]
        %v199 = vld [vmem:[%s152 + $0x68] sm:$0xff]
        %v200 = vld [vmem:[%s152 + $0x70] sm:$0xff]
        %v201 = vld [vmem:[%s152 + $0x78] sm:$0xff]
        %v202 = vld [vmem:[%s152 + $0x80] sm:$0xff]
        %v203 = vld [vmem:[%s152 + $0x88] sm:$0xff]
        %v204 = vld [vmem:[%s152 + $0x90] sm:$0xff]
        %v205 = vld [vmem:[%s152 + $0x98] sm:$0xff]
        %v206 = vld [vmem:[%s152 + $0xa0] sm:$0xff]
        %v207 = vld [vmem:[%s152 + $0xa8] sm:$0xff]
        %v208 = vld [vmem:[%s152 + $0xb0] sm:$0xff]
        %v209 = vld [vmem:[%s152 + $0xb8] sm:$0xff]
        %v210 = vld [vmem:[%s152 + $0xc0] sm:$0xff]
        %v211 = vld [vmem:[%s152 + $0xc8] sm:$0xff]
        %v212 = vld [vmem:[%s152 + $0xd0] sm:$0xff]
        %v213 = vld [vmem:[%s152 + $0xd8] sm:$0xff]
        %v214 = vld [vmem:[%s152 + $0xe0] sm:$0xff]
        %v215 = vld [vmem:[%s152 + $0xe8] sm:$0xff]
        %v216 = vld [vmem:[%s152 + $0xf0] sm:$0xff]
        %v217 = vld [vmem:[%s152 + $0xf8] sm:$0xff]
        %v218 = vld [vmem:[%s152 + $0x100] sm:$0xff]
        %v219 = vld [vmem:[%s152 + $0x108] sm:$0xff]
        %v220 = vld [vmem:[%s152 + $0x110] sm:$0xff]
        %v221 = vld [vmem:[%s152 + $0x118] sm:$0xff]
        %v222 = vld [vmem:[%s152 + $0x120] sm:$0xff]
        %v223 = vld [vmem:[%s152 + $0x128] sm:$0xff]
        %v224 = vld [vmem:[%s152 + $0x130] sm:$0xff]
        %v225 = vld [vmem:[%s152 + $0x138] sm:$0xff]
        %v226 = vld [vmem:[%s152 + $0x140] sm:$0xff]
        %v227 = vld [vmem:[%s152 + $0x148] sm:$0xff]
        %v228 = vld [vmem:[%s152 + $0x150] sm:$0xff]
        %v229 = vld [vmem:[%s152 + $0x158] sm:$0xff]
        %v230 = vld [vmem:[%s152 + $0x160] sm:$0xff]
        %v231 = vld [vmem:[%s152 + $0x168] sm:$0xff]
        %v232 = vld [vmem:[%s152 + $0x170] sm:$0xff]
        %v233 = vld [vmem:[%s152 + $0x178] sm:$0xff]
        %v234 = vld [vmem:[%s152 + $0x180] sm:$0xff]
        %v235 = vld [vmem:[%s152 + $0x188] sm:$0xff]
        %v236 = vld [vmem:[%s152 + $0x190] sm:$0xff]
        %v237 = vld [vmem:[%s152 + $0x198] sm:$0xff]
        %v238 = vld [vmem:[%s152 + $0x1a0] sm:$0xff]
        %v239 = vld [vmem:[%s152 + $0x1a8] sm:$0xff]
        %v240 = vld [vmem:[%s152 + $0x1b0] sm:$0xff]
        %v241 = vld [vmem:[%s152 + $0x1b8] sm:$0xff]
        %v242 = vld [vmem:[%s152 + $0x1c0] sm:$0xff]
        %v243 = vld [vmem:[%s152 + $0x1c8] sm:$0xff]
        %v244 = vld [vmem:[%s152 + $0x1d0] sm:$0xff]
        %v245 = vld [vmem:[%s152 + $0x1d8] sm:$0xff]
        %v246 = vld [vmem:[%s152 + $0x1e0] sm:$0xff]
        %v247 = vld [vmem:[%s152 + $0x1e8] sm:$0xff]
        %v248 = vld [vmem:[%s152 + $0x1f0] sm:$0xff]
        %v249 = vld [vmem:[%s152 + $0x1f8] sm:$0xff]
        %v250 = vld [vmem:[%s183] sm:$0xff]
        %v251 = vld [vmem:[%s183 + $0x8] sm:$0xff]
        %v252 = vld [vmem:[%s183 + $0x10] sm:$0xff]
        %v253 = vld [vmem:[%s183 + $0x18] sm:$0xff]
        %v254 = vld [vmem:[%s183 + $0x20] sm:$0xff]
        %v255 = vld [vmem:[%s183 + $0x28] sm:$0xff]
        %v256 = vld [vmem:[%s183 + $0x30] sm:$0xff]
        %v257 = vld [vmem:[%s183 + $0x38] sm:$0xff]
        %v258 = vld [vmem:[%s183 + $0x40] sm:$0xff]
        %v259 = vld [vmem:[%s183 + $0x48] sm:$0xff]
        %v260 = vld [vmem:[%s183 + $0x50] sm:$0xff]
        %v261 = vld [vmem:[%s183 + $0x58] sm:$0xff]
        %v262 = vld [vmem:[%s183 + $0x60] sm:$0xff]
        %v263 = vld [vmem:[%s183 + $0x68] sm:$0xff]
        %v264 = vld [vmem:[%s183 + $0x70] sm:$0xff]
        %v265 = vld [vmem:[%s183 + $0x78] sm:$0xff]
        %v266 = vld [vmem:[%s183 + $0x80] sm:$0xff]
        %v267 = vld [vmem:[%s183 + $0x88] sm:$0xff]
        %v268 = vld [vmem:[%s183 + $0x90] sm:$0xff]
        %v269 = vld [vmem:[%s183 + $0x98] sm:$0xff]
        %v270 = vld [vmem:[%s183 + $0xa0] sm:$0xff]
        %v271 = vld [vmem:[%s183 + $0xa8] sm:$0xff]
        %v272 = vld [vmem:[%s183 + $0xb0] sm:$0xff]
        %v273 = vld [vmem:[%s183 + $0xb8] sm:$0xff]
        %v274 = vld [vmem:[%s183 + $0xc0] sm:$0xff]
        %v275 = vld [vmem:[%s183 + $0xc8] sm:$0xff]
        %v276 = vld [vmem:[%s183 + $0xd0] sm:$0xff]
        %v277 = vld [vmem:[%s183 + $0xd8] sm:$0xff]
        %v278 = vld [vmem:[%s183 + $0xe0] sm:$0xff]
        %v279 = vld [vmem:[%s183 + $0xe8] sm:$0xff]
        %v280 = vld [vmem:[%s183 + $0xf0] sm:$0xff]
        %v281 = vld [vmem:[%s183 + $0xf8] sm:$0xff]
        %v282 = vld [vmem:[%s183 + $0x100] sm:$0xff]
        %v283 = vld [vmem:[%s183 + $0x108] sm:$0xff]
        %v284 = vld [vmem:[%s183 + $0x110] sm:$0xff]
        %v285 = vld [vmem:[%s183 + $0x118] sm:$0xff]
        %v286 = vld [vmem:[%s183 + $0x120] sm:$0xff]
        %v287 = vld [vmem:[%s183 + $0x128] sm:$0xff]
        %v288 = vld [vmem:[%s183 + $0x130] sm:$0xff]
        %v289 = vld [vmem:[%s183 + $0x138] sm:$0xff]
        %v290 = vld [vmem:[%s183 + $0x140] sm:$0xff]
        %v291 = vld [vmem:[%s183 + $0x148] sm:$0xff]
        %v292 = vld [vmem:[%s183 + $0x150] sm:$0xff]
        %v293 = vld [vmem:[%s183 + $0x158] sm:$0xff]
        %v294 = vld [vmem:[%s183 + $0x160] sm:$0xff]
        %v295 = vld [vmem:[%s183 + $0x168] sm:$0xff]
        %v296 = vld [vmem:[%s183 + $0x170] sm:$0xff]
        %v297 = vld [vmem:[%s183 + $0x178] sm:$0xff]
        %v298 = vld [vmem:[%s183 + $0x180] sm:$0xff]
        %v299 = vld [vmem:[%s183 + $0x188] sm:$0xff]
        %v300 = vld [vmem:[%s183 + $0x190] sm:$0xff]
        %v301 = vld [vmem:[%s183 + $0x198] sm:$0xff]
        %v302 = vld [vmem:[%s183 + $0x1a0] sm:$0xff]
        %v303 = vld [vmem:[%s183 + $0x1a8] sm:$0xff]
        %v304 = vld [vmem:[%s183 + $0x1b0] sm:$0xff]
        %v305 = vld [vmem:[%s183 + $0x1b8] sm:$0xff]
        %v306 = vld [vmem:[%s183 + $0x1c0] sm:$0xff]
        %v307 = vld [vmem:[%s183 + $0x1c8] sm:$0xff]
        %v308 = vld [vmem:[%s183 + $0x1d0] sm:$0xff]
        %v309 = vld [vmem:[%s183 + $0x1d8] sm:$0xff]
        %v310 = vld [vmem:[%s183 + $0x1e0] sm:$0xff]
        %v311 = vld [vmem:[%s183 + $0x1e8] sm:$0xff]
        %v312 = vld [vmem:[%s183 + $0x1f0] sm:$0xff]
        %v313 = vld [vmem:[%s183 + $0x1f8] sm:$0xff]
        %315 = vset.pattern.permute.xlu0 0
        %316 = vperm.xlu0 %315, %v250
        %v317 = vpop.permute.xlu0 %316
        %320 = vset.pattern.permute.xlu0 0
        %321 = vperm.xlu0 %320, %v251
        %v322 = vpop.permute.xlu0 %321
        %325 = vset.pattern.permute.xlu0 0
        %326 = vperm.xlu0 %325, %v252
        %v327 = vpop.permute.xlu0 %326
        %330 = vset.pattern.permute.xlu0 0
        %331 = vperm.xlu0 %330, %v253
        %v332 = vpop.permute.xlu0 %331
        %335 = vset.pattern.permute.xlu0 0
        %336 = vperm.xlu0 %335, %v254
        %v337 = vpop.permute.xlu0 %336
        %340 = vset.pattern.permute.xlu0 0
        %341 = vperm.xlu0 %340, %v255
        %v342 = vpop.permute.xlu0 %341
        %345 = vset.pattern.permute.xlu0 0
        %346 = vperm.xlu0 %345, %v256
        %v347 = vpop.permute.xlu0 %346
        %350 = vset.pattern.permute.xlu0 0
        %351 = vperm.xlu0 %350, %v257
        %v352 = vpop.permute.xlu0 %351
        %355 = vset.pattern.permute.xlu0 0
        %356 = vperm.xlu0 %355, %v258
        %v357 = vpop.permute.xlu0 %356
        %360 = vset.pattern.permute.xlu0 0
        %361 = vperm.xlu0 %360, %v259
        %v362 = vpop.permute.xlu0 %361
        %365 = vset.pattern.permute.xlu0 0
        %366 = vperm.xlu0 %365, %v260
        %v367 = vpop.permute.xlu0 %366
        %370 = vset.pattern.permute.xlu0 0
        %371 = vperm.xlu0 %370, %v261
        %v372 = vpop.permute.xlu0 %371
        %375 = vset.pattern.permute.xlu0 0
        %376 = vperm.xlu0 %375, %v262
        %v377 = vpop.permute.xlu0 %376
        %380 = vset.pattern.permute.xlu0 0
        %381 = vperm.xlu0 %380, %v263
        %v382 = vpop.permute.xlu0 %381
        %385 = vset.pattern.permute.xlu0 0
        %386 = vperm.xlu0 %385, %v264
        %v387 = vpop.permute.xlu0 %386
        %390 = vset.pattern.permute.xlu0 0
        %391 = vperm.xlu0 %390, %v265
        %v392 = vpop.permute.xlu0 %391
        %395 = vset.pattern.permute.xlu0 0
        %396 = vperm.xlu0 %395, %v266
        %v397 = vpop.permute.xlu0 %396
        %400 = vset.pattern.permute.xlu0 0
        %401 = vperm.xlu0 %400, %v267
        %v402 = vpop.permute.xlu0 %401
        %405 = vset.pattern.permute.xlu0 0
        %406 = vperm.xlu0 %405, %v268
        %v407 = vpop.permute.xlu0 %406
        %410 = vset.pattern.permute.xlu0 0
        %411 = vperm.xlu0 %410, %v269
        %v412 = vpop.permute.xlu0 %411
        %415 = vset.pattern.permute.xlu0 0
        %416 = vperm.xlu0 %415, %v270
        %v417 = vpop.permute.xlu0 %416
        %420 = vset.pattern.permute.xlu0 0
        %421 = vperm.xlu0 %420, %v271
        %v422 = vpop.permute.xlu0 %421
        %425 = vset.pattern.permute.xlu0 0
        %426 = vperm.xlu0 %425, %v272
        %v427 = vpop.permute.xlu0 %426
        %430 = vset.pattern.permute.xlu0 0
        %431 = vperm.xlu0 %430, %v273
        %v432 = vpop.permute.xlu0 %431
        %435 = vset.pattern.permute.xlu0 0
        %436 = vperm.xlu0 %435, %v274
        %v437 = vpop.permute.xlu0 %436
        %440 = vset.pattern.permute.xlu0 0
        %441 = vperm.xlu0 %440, %v275
        %v442 = vpop.permute.xlu0 %441
        %445 = vset.pattern.permute.xlu0 0
        %446 = vperm.xlu0 %445, %v276
        %v447 = vpop.permute.xlu0 %446
        %450 = vset.pattern.permute.xlu0 0
        %451 = vperm.xlu0 %450, %v277
        %v452 = vpop.permute.xlu0 %451
        %455 = vset.pattern.permute.xlu0 0
        %456 = vperm.xlu0 %455, %v278
        %v457 = vpop.permute.xlu0 %456
        %460 = vset.pattern.permute.xlu0 0
        %461 = vperm.xlu0 %460, %v279
        %v462 = vpop.permute.xlu0 %461
        %465 = vset.pattern.permute.xlu0 0
        %466 = vperm.xlu0 %465, %v280
        %v467 = vpop.permute.xlu0 %466
        %470 = vset.pattern.permute.xlu0 0
        %471 = vperm.xlu0 %470, %v281
        %v472 = vpop.permute.xlu0 %471
        %475 = vset.pattern.permute.xlu0 0
        %476 = vperm.xlu0 %475, %v282
        %v477 = vpop.permute.xlu0 %476
        %480 = vset.pattern.permute.xlu0 0
        %481 = vperm.xlu0 %480, %v283
        %v482 = vpop.permute.xlu0 %481
        %485 = vset.pattern.permute.xlu0 0
        %486 = vperm.xlu0 %485, %v284
        %v487 = vpop.permute.xlu0 %486
        %490 = vset.pattern.permute.xlu0 0
        %491 = vperm.xlu0 %490, %v285
        %v492 = vpop.permute.xlu0 %491
        %495 = vset.pattern.permute.xlu0 0
        %496 = vperm.xlu0 %495, %v286
        %v497 = vpop.permute.xlu0 %496
        %500 = vset.pattern.permute.xlu0 0
        %501 = vperm.xlu0 %500, %v287
        %v502 = vpop.permute.xlu0 %501
        %505 = vset.pattern.permute.xlu0 0
        %506 = vperm.xlu0 %505, %v288
        %v507 = vpop.permute.xlu0 %506
        %510 = vset.pattern.permute.xlu0 0
        %511 = vperm.xlu0 %510, %v289
        %v512 = vpop.permute.xlu0 %511
        %515 = vset.pattern.permute.xlu0 0
        %516 = vperm.xlu0 %515, %v290
        %v517 = vpop.permute.xlu0 %516
        %520 = vset.pattern.permute.xlu0 0
        %521 = vperm.xlu0 %520, %v291
        %v522 = vpop.permute.xlu0 %521
        %525 = vset.pattern.permute.xlu0 0
        %526 = vperm.xlu0 %525, %v292
        %v527 = vpop.permute.xlu0 %526
        %530 = vset.pattern.permute.xlu0 0
        %531 = vperm.xlu0 %530, %v293
        %v532 = vpop.permute.xlu0 %531
        %535 = vset.pattern.permute.xlu0 0
        %536 = vperm.xlu0 %535, %v294
        %v537 = vpop.permute.xlu0 %536
        %540 = vset.pattern.permute.xlu0 0
        %541 = vperm.xlu0 %540, %v295
        %v542 = vpop.permute.xlu0 %541
        %545 = vset.pattern.permute.xlu0 0
        %546 = vperm.xlu0 %545, %v296
        %v547 = vpop.permute.xlu0 %546
        %550 = vset.pattern.permute.xlu0 0
        %551 = vperm.xlu0 %550, %v297
        %v552 = vpop.permute.xlu0 %551
        %555 = vset.pattern.permute.xlu0 0
        %556 = vperm.xlu0 %555, %v298
        %v557 = vpop.permute.xlu0 %556
        %560 = vset.pattern.permute.xlu0 0
        %561 = vperm.xlu0 %560, %v299
        %v562 = vpop.permute.xlu0 %561
        %565 = vset.pattern.permute.xlu0 0
        %566 = vperm.xlu0 %565, %v300
        %v567 = vpop.permute.xlu0 %566
        %570 = vset.pattern.permute.xlu0 0
        %571 = vperm.xlu0 %570, %v301
        %v572 = vpop.permute.xlu0 %571
        %575 = vset.pattern.permute.xlu0 0
        %576 = vperm.xlu0 %575, %v302
        %v577 = vpop.permute.xlu0 %576
        %580 = vset.pattern.permute.xlu0 0
        %581 = vperm.xlu0 %580, %v303
        %v582 = vpop.permute.xlu0 %581
        %585 = vset.pattern.permute.xlu0 0
        %586 = vperm.xlu0 %585, %v304
        %v587 = vpop.permute.xlu0 %586
        %590 = vset.pattern.permute.xlu0 0
        %591 = vperm.xlu0 %590, %v305
        %v592 = vpop.permute.xlu0 %591
        %595 = vset.pattern.permute.xlu0 0
        %596 = vperm.xlu0 %595, %v306
        %v597 = vpop.permute.xlu0 %596
        %600 = vset.pattern.permute.xlu0 0
        %601 = vperm.xlu0 %600, %v307
        %v602 = vpop.permute.xlu0 %601
        %605 = vset.pattern.permute.xlu0 0
        %606 = vperm.xlu0 %605, %v308
        %v607 = vpop.permute.xlu0 %606
        %610 = vset.pattern.permute.xlu0 0
        %611 = vperm.xlu0 %610, %v309
        %v612 = vpop.permute.xlu0 %611
        %615 = vset.pattern.permute.xlu0 0
        %616 = vperm.xlu0 %615, %v310
        %v617 = vpop.permute.xlu0 %616
        %620 = vset.pattern.permute.xlu0 0
        %621 = vperm.xlu0 %620, %v311
        %v622 = vpop.permute.xlu0 %621
        %625 = vset.pattern.permute.xlu0 0
        %626 = vperm.xlu0 %625, %v312
        %v627 = vpop.permute.xlu0 %626
        %630 = vset.pattern.permute.xlu0 0
        %631 = vperm.xlu0 %630, %v313
        %v632 = vpop.permute.xlu0 %631
        %v634 = vmul.f32 %v317, %v186
        %v635 = vmul.f32 %v322, %v187
        %v636 = vmul.f32 %v327, %v188
        %v637 = vmul.f32 %v332, %v189
        %v638 = vmul.f32 %v337, %v190
        %v639 = vmul.f32 %v342, %v191
        %v640 = vmul.f32 %v347, %v192
        %v641 = vmul.f32 %v352, %v193
        %v642 = vmul.f32 %v357, %v194
        %v643 = vmul.f32 %v362, %v195
        %v644 = vmul.f32 %v367, %v196
        %v645 = vmul.f32 %v372, %v197
        %v646 = vmul.f32 %v377, %v198
        %v647 = vmul.f32 %v382, %v199
        %v648 = vmul.f32 %v387, %v200
        %v649 = vmul.f32 %v392, %v201
        %v650 = vmul.f32 %v397, %v202
        %v651 = vmul.f32 %v402, %v203
        %v652 = vmul.f32 %v407, %v204
        %v653 = vmul.f32 %v412, %v205
        %v654 = vmul.f32 %v417, %v206
        %v655 = vmul.f32 %v422, %v207
        %v656 = vmul.f32 %v427, %v208
        %v657 = vmul.f32 %v432, %v209
        %v658 = vmul.f32 %v437, %v210
        %v659 = vmul.f32 %v442, %v211
        %v660 = vmul.f32 %v447, %v212
        %v661 = vmul.f32 %v452, %v213
        %v662 = vmul.f32 %v457, %v214
        %v663 = vmul.f32 %v462, %v215
        %v664 = vmul.f32 %v467, %v216
        %v665 = vmul.f32 %v472, %v217
        %v666 = vmul.f32 %v477, %v218
        %v667 = vmul.f32 %v482, %v219
        %v668 = vmul.f32 %v487, %v220
        %v669 = vmul.f32 %v492, %v221
        %v670 = vmul.f32 %v497, %v222
        %v671 = vmul.f32 %v502, %v223
        %v672 = vmul.f32 %v507, %v224
        %v673 = vmul.f32 %v512, %v225
        %v674 = vmul.f32 %v517, %v226
        %v675 = vmul.f32 %v522, %v227
        %v676 = vmul.f32 %v527, %v228
        %v677 = vmul.f32 %v532, %v229
        %v678 = vmul.f32 %v537, %v230
        %v679 = vmul.f32 %v542, %v231
        %v680 = vmul.f32 %v547, %v232
        %v681 = vmul.f32 %v552, %v233
        %v682 = vmul.f32 %v557, %v234
        %v683 = vmul.f32 %v562, %v235
        %v684 = vmul.f32 %v567, %v236
        %v685 = vmul.f32 %v572, %v237
        %v686 = vmul.f32 %v577, %v238
        %v687 = vmul.f32 %v582, %v239
        %v688 = vmul.f32 %v587, %v240
        %v689 = vmul.f32 %v592, %v241
        %v690 = vmul.f32 %v597, %v242
        %v691 = vmul.f32 %v602, %v243
        %v692 = vmul.f32 %v607, %v244
        %v693 = vmul.f32 %v612, %v245
        %v694 = vmul.f32 %v617, %v246
        %v695 = vmul.f32 %v622, %v247
        %v696 = vmul.f32 %v627, %v248
        %v697 = vmul.f32 %v632, %v249
        %698 = vset.pattern.permute.xlu0 1
        %699 = vperm.xlu0 %698, %v250
        %v700 = vpop.permute.xlu0 %699
        %702 = vset.pattern.permute.xlu0 1
        %703 = vperm.xlu0 %702, %v251
        %v704 = vpop.permute.xlu0 %703
        %706 = vset.pattern.permute.xlu0 1
        %707 = vperm.xlu0 %706, %v252
        %v708 = vpop.permute.xlu0 %707
        %710 = vset.pattern.permute.xlu0 1
        %711 = vperm.xlu0 %710, %v253
        %v712 = vpop.permute.xlu0 %711
        %714 = vset.pattern.permute.xlu0 1
        %715 = vperm.xlu0 %714, %v254
        %v716 = vpop.permute.xlu0 %715
        %718 = vset.pattern.permute.xlu0 1
        %719 = vperm.xlu0 %718, %v255
        %v720 = vpop.permute.xlu0 %719
        %722 = vset.pattern.permute.xlu0 1
        %723 = vperm.xlu0 %722, %v256
        %v724 = vpop.permute.xlu0 %723
        %726 = vset.pattern.permute.xlu0 1
        %727 = vperm.xlu0 %726, %v257
        %v728 = vpop.permute.xlu0 %727
        %730 = vset.pattern.permute.xlu0 1
        %731 = vperm.xlu0 %730, %v258
        %v732 = vpop.permute.xlu0 %731
        %734 = vset.pattern.permute.xlu0 1
        %735 = vperm.xlu0 %734, %v259
        %v736 = vpop.permute.xlu0 %735
        %738 = vset.pattern.permute.xlu0 1
        %739 = vperm.xlu0 %738, %v260
        %v740 = vpop.permute.xlu0 %739
        %742 = vset.pattern.permute.xlu0 1
        %743 = vperm.xlu0 %742, %v261
        %v744 = vpop.permute.xlu0 %743
        %746 = vset.pattern.permute.xlu0 1
        %747 = vperm.xlu0 %746, %v262
        %v748 = vpop.permute.xlu0 %747
        %750 = vset.pattern.permute.xlu0 1
        %751 = vperm.xlu0 %750, %v263
        %v752 = vpop.permute.xlu0 %751
        %754 = vset.pattern.permute.xlu0 1
        %755 = vperm.xlu0 %754, %v264
        %v756 = vpop.permute.xlu0 %755
        %758 = vset.pattern.permute.xlu0 1
        %759 = vperm.xlu0 %758, %v265
        %v760 = vpop.permute.xlu0 %759
        %762 = vset.pattern.permute.xlu0 1
        %763 = vperm.xlu0 %762, %v266
        %v764 = vpop.permute.xlu0 %763
        %766 = vset.pattern.permute.xlu0 1
        %767 = vperm.xlu0 %766, %v267
        %v768 = vpop.permute.xlu0 %767
        %770 = vset.pattern.permute.xlu0 1
        %771 = vperm.xlu0 %770, %v268
        %v772 = vpop.permute.xlu0 %771
        %774 = vset.pattern.permute.xlu0 1
        %775 = vperm.xlu0 %774, %v269
        %v776 = vpop.permute.xlu0 %775
        %778 = vset.pattern.permute.xlu0 1
        %779 = vperm.xlu0 %778, %v270
        %v780 = vpop.permute.xlu0 %779
        %782 = vset.pattern.permute.xlu0 1
        %783 = vperm.xlu0 %782, %v271
        %v784 = vpop.permute.xlu0 %783
        %786 = vset.pattern.permute.xlu0 1
        %787 = vperm.xlu0 %786, %v272
        %v788 = vpop.permute.xlu0 %787
        %790 = vset.pattern.permute.xlu0 1
        %791 = vperm.xlu0 %790, %v273
        %v792 = vpop.permute.xlu0 %791
        %794 = vset.pattern.permute.xlu0 1
        %795 = vperm.xlu0 %794, %v274
        %v796 = vpop.permute.xlu0 %795
        %798 = vset.pattern.permute.xlu0 1
        %799 = vperm.xlu0 %798, %v275
        %v800 = vpop.permute.xlu0 %799
        %802 = vset.pattern.permute.xlu0 1
        %803 = vperm.xlu0 %802, %v276
        %v804 = vpop.permute.xlu0 %803
        %806 = vset.pattern.permute.xlu0 1
        %807 = vperm.xlu0 %806, %v277
        %v808 = vpop.permute.xlu0 %807
        %810 = vset.pattern.permute.xlu0 1
        %811 = vperm.xlu0 %810, %v278
        %v812 = vpop.permute.xlu0 %811
        %814 = vset.pattern.permute.xlu0 1
        %815 = vperm.xlu0 %814, %v279
        %v816 = vpop.permute.xlu0 %815
        %818 = vset.pattern.permute.xlu0 1
        %819 = vperm.xlu0 %818, %v280
        %v820 = vpop.permute.xlu0 %819
        %822 = vset.pattern.permute.xlu0 1
        %823 = vperm.xlu0 %822, %v281
        %v824 = vpop.permute.xlu0 %823
        %826 = vset.pattern.permute.xlu0 1
        %827 = vperm.xlu0 %826, %v282
        %v828 = vpop.permute.xlu0 %827
        %830 = vset.pattern.permute.xlu0 1
        %831 = vperm.xlu0 %830, %v283
        %v832 = vpop.permute.xlu0 %831
        %834 = vset.pattern.permute.xlu0 1
        %835 = vperm.xlu0 %834, %v284
        %v836 = vpop.permute.xlu0 %835
        %838 = vset.pattern.permute.xlu0 1
        %839 = vperm.xlu0 %838, %v285
        %v840 = vpop.permute.xlu0 %839
        %842 = vset.pattern.permute.xlu0 1
        %843 = vperm.xlu0 %842, %v286
        %v844 = vpop.permute.xlu0 %843
        %846 = vset.pattern.permute.xlu0 1
        %847 = vperm.xlu0 %846, %v287
        %v848 = vpop.permute.xlu0 %847
        %850 = vset.pattern.permute.xlu0 1
        %851 = vperm.xlu0 %850, %v288
        %v852 = vpop.permute.xlu0 %851
        %854 = vset.pattern.permute.xlu0 1
        %855 = vperm.xlu0 %854, %v289
        %v856 = vpop.permute.xlu0 %855
        %858 = vset.pattern.permute.xlu0 1
        %859 = vperm.xlu0 %858, %v290
        %v860 = vpop.permute.xlu0 %859
        %862 = vset.pattern.permute.xlu0 1
        %863 = vperm.xlu0 %862, %v291
        %v864 = vpop.permute.xlu0 %863
        %866 = vset.pattern.permute.xlu0 1
        %867 = vperm.xlu0 %866, %v292
        %v868 = vpop.permute.xlu0 %867
        %870 = vset.pattern.permute.xlu0 1
        %871 = vperm.xlu0 %870, %v293
        %v872 = vpop.permute.xlu0 %871
        %874 = vset.pattern.permute.xlu0 1
        %875 = vperm.xlu0 %874, %v294
        %v876 = vpop.permute.xlu0 %875
        %878 = vset.pattern.permute.xlu0 1
        %879 = vperm.xlu0 %878, %v295
        %v880 = vpop.permute.xlu0 %879
        %882 = vset.pattern.permute.xlu0 1
        %883 = vperm.xlu0 %882, %v296
        %v884 = vpop.permute.xlu0 %883
        %886 = vset.pattern.permute.xlu0 1
        %887 = vperm.xlu0 %886, %v297
        %v888 = vpop.permute.xlu0 %887
        %890 = vset.pattern.permute.xlu0 1
        %891 = vperm.xlu0 %890, %v298
        %v892 = vpop.permute.xlu0 %891
        %894 = vset.pattern.permute.xlu0 1
        %895 = vperm.xlu0 %894, %v299
        %v896 = vpop.permute.xlu0 %895
        %898 = vset.pattern.permute.xlu0 1
        %899 = vperm.xlu0 %898, %v300
        %v900 = vpop.permute.xlu0 %899
        %902 = vset.pattern.permute.xlu0 1
        %903 = vperm.xlu0 %902, %v301
        %v904 = vpop.permute.xlu0 %903
        %906 = vset.pattern.permute.xlu0 1
        %907 = vperm.xlu0 %906, %v302
        %v908 = vpop.permute.xlu0 %907
        %910 = vset.pattern.permute.xlu0 1
        %911 = vperm.xlu0 %910, %v303
        %v912 = vpop.permute.xlu0 %911
        %914 = vset.pattern.permute.xlu0 1
        %915 = vperm.xlu0 %914, %v304
        %v916 = vpop.permute.xlu0 %915
        %918 = vset.pattern.permute.xlu0 1
        %919 = vperm.xlu0 %918, %v305
        %v920 = vpop.permute.xlu0 %919
        %922 = vset.pattern.permute.xlu0 1
        %923 = vperm.xlu0 %922, %v306
        %v924 = vpop.permute.xlu0 %923
        %926 = vset.pattern.permute.xlu0 1
        %927 = vperm.xlu0 %926, %v307
        %v928 = vpop.permute.xlu0 %927
        %930 = vset.pattern.permute.xlu0 1
        %931 = vperm.xlu0 %930, %v308
        %v932 = vpop.permute.xlu0 %931
        %934 = vset.pattern.permute.xlu0 1
        %935 = vperm.xlu0 %934, %v309
        %v936 = vpop.permute.xlu0 %935
        %938 = vset.pattern.permute.xlu0 1
        %939 = vperm.xlu0 %938, %v310
        %v940 = vpop.permute.xlu0 %939
        %942 = vset.pattern.permute.xlu0 1
        %943 = vperm.xlu0 %942, %v311
        %v944 = vpop.permute.xlu0 %943
        %946 = vset.pattern.permute.xlu0 1
        %947 = vperm.xlu0 %946, %v312
        %v948 = vpop.permute.xlu0 %947
        %950 = vset.pattern.permute.xlu0 1
        %951 = vperm.xlu0 %950, %v313
        %v952 = vpop.permute.xlu0 %951
        %v954 = vmul.f32 %v700, %v186
        %v955 = vmul.f32 %v704, %v187
        %v956 = vmul.f32 %v708, %v188
        %v957 = vmul.f32 %v712, %v189
        %v958 = vmul.f32 %v716, %v190
        %v959 = vmul.f32 %v720, %v191
        %v960 = vmul.f32 %v724, %v192
        %v961 = vmul.f32 %v728, %v193
        %v962 = vmul.f32 %v732, %v194
        %v963 = vmul.f32 %v736, %v195
        %v964 = vmul.f32 %v740, %v196
        %v965 = vmul.f32 %v744, %v197
        %v966 = vmul.f32 %v748, %v198
        %v967 = vmul.f32 %v752, %v199
        %v968 = vmul.f32 %v756, %v200
        %v969 = vmul.f32 %v760, %v201
        %v970 = vmul.f32 %v764, %v202
        %v971 = vmul.f32 %v768, %v203
        %v972 = vmul.f32 %v772, %v204
        %v973 = vmul.f32 %v776, %v205
        %v974 = vmul.f32 %v780, %v206
        %v975 = vmul.f32 %v784, %v207
        %v976 = vmul.f32 %v788, %v208
        %v977 = vmul.f32 %v792, %v209
        %v978 = vmul.f32 %v796, %v210
        %v979 = vmul.f32 %v800, %v211
        %v980 = vmul.f32 %v804, %v212
        %v981 = vmul.f32 %v808, %v213
        %v982 = vmul.f32 %v812, %v214
        %v983 = vmul.f32 %v816, %v215
        %v984 = vmul.f32 %v820, %v216
        %v985 = vmul.f32 %v824, %v217
        %v986 = vmul.f32 %v828, %v218
        %v987 = vmul.f32 %v832, %v219
        %v988 = vmul.f32 %v836, %v220
        %v989 = vmul.f32 %v840, %v221
        %v990 = vmul.f32 %v844, %v222
        %v991 = vmul.f32 %v848, %v223
        %v992 = vmul.f32 %v852, %v224
        %v993 = vmul.f32 %v856, %v225
        %v994 = vmul.f32 %v860, %v226
        %v995 = vmul.f32 %v864, %v227
        %v996 = vmul.f32 %v868, %v228
        %v997 = vmul.f32 %v872, %v229
        %v998 = vmul.f32 %v876, %v230
        %v999 = vmul.f32 %v880, %v231
        %v1000 = vmul.f32 %v884, %v232
        %v1001 = vmul.f32 %v888, %v233
        %v1002 = vmul.f32 %v892, %v234
        %v1003 = vmul.f32 %v896, %v235
        %v1004 = vmul.f32 %v900, %v236
        %v1005 = vmul.f32 %v904, %v237
        %v1006 = vmul.f32 %v908, %v238
        %v1007 = vmul.f32 %v912, %v239
        %v1008 = vmul.f32 %v916, %v240
        %v1009 = vmul.f32 %v920, %v241
        %v1010 = vmul.f32 %v924, %v242
        %v1011 = vmul.f32 %v928, %v243
        %v1012 = vmul.f32 %v932, %v244
        %v1013 = vmul.f32 %v936, %v245
        %v1014 = vmul.f32 %v940, %v246
        %v1015 = vmul.f32 %v944, %v247
        %v1016 = vmul.f32 %v948, %v248
        %v1017 = vmul.f32 %v952, %v249
        %1018 = vset.pattern.permute.xlu0 2
        %1019 = vperm.xlu0 %1018, %v250
        %v1020 = vpop.permute.xlu0 %1019
        %1022 = vset.pattern.permute.xlu0 2
        %1023 = vperm.xlu0 %1022, %v251
        %v1024 = vpop.permute.xlu0 %1023
        %1026 = vset.pattern.permute.xlu0 2
        %1027 = vperm.xlu0 %1026, %v252
        %v1028 = vpop.permute.xlu0 %1027
        %1030 = vset.pattern.permute.xlu0 2
        %1031 = vperm.xlu0 %1030, %v253
        %v1032 = vpop.permute.xlu0 %1031
        %1034 = vset.pattern.permute.xlu0 2
        %1035 = vperm.xlu0 %1034, %v254
        %v1036 = vpop.permute.xlu0 %1035
        %1038 = vset.pattern.permute.xlu0 2
        %1039 = vperm.xlu0 %1038, %v255
        %v1040 = vpop.permute.xlu0 %1039
        %1042 = vset.pattern.permute.xlu0 2
        %1043 = vperm.xlu0 %1042, %v256
        %v1044 = vpop.permute.xlu0 %1043
        %1046 = vset.pattern.permute.xlu0 2
        %1047 = vperm.xlu0 %1046, %v257
        %v1048 = vpop.permute.xlu0 %1047
        %1050 = vset.pattern.permute.xlu0 2
        %1051 = vperm.xlu0 %1050, %v258
        %v1052 = vpop.permute.xlu0 %1051
        %1054 = vset.pattern.permute.xlu0 2
        %1055 = vperm.xlu0 %1054, %v259
        %v1056 = vpop.permute.xlu0 %1055
        %1058 = vset.pattern.permute.xlu0 2
        %1059 = vperm.xlu0 %1058, %v260
        %v1060 = vpop.permute.xlu0 %1059
        %1062 = vset.pattern.permute.xlu0 2
        %1063 = vperm.xlu0 %1062, %v261
        %v1064 = vpop.permute.xlu0 %1063
        %1066 = vset.pattern.permute.xlu0 2
        %1067 = vperm.xlu0 %1066, %v262
        %v1068 = vpop.permute.xlu0 %1067
        %1070 = vset.pattern.permute.xlu0 2
        %1071 = vperm.xlu0 %1070, %v263
        %v1072 = vpop.permute.xlu0 %1071
        %1074 = vset.pattern.permute.xlu0 2
        %1075 = vperm.xlu0 %1074, %v264
        %v1076 = vpop.permute.xlu0 %1075
        %1078 = vset.pattern.permute.xlu0 2
        %1079 = vperm.xlu0 %1078, %v265
        %v1080 = vpop.permute.xlu0 %1079
        %1082 = vset.pattern.permute.xlu0 2
        %1083 = vperm.xlu0 %1082, %v266
        %v1084 = vpop.permute.xlu0 %1083
        %1086 = vset.pattern.permute.xlu0 2
        %1087 = vperm.xlu0 %1086, %v267
        %v1088 = vpop.permute.xlu0 %1087
        %1090 = vset.pattern.permute.xlu0 2
        %1091 = vperm.xlu0 %1090, %v268
        %v1092 = vpop.permute.xlu0 %1091
        %1094 = vset.pattern.permute.xlu0 2
        %1095 = vperm.xlu0 %1094, %v269
        %v1096 = vpop.permute.xlu0 %1095
        %1098 = vset.pattern.permute.xlu0 2
        %1099 = vperm.xlu0 %1098, %v270
        %v1100 = vpop.permute.xlu0 %1099
        %1102 = vset.pattern.permute.xlu0 2
        %1103 = vperm.xlu0 %1102, %v271
        %v1104 = vpop.permute.xlu0 %1103
        %1106 = vset.pattern.permute.xlu0 2
        %1107 = vperm.xlu0 %1106, %v272
        %v1108 = vpop.permute.xlu0 %1107
        %1110 = vset.pattern.permute.xlu0 2
        %1111 = vperm.xlu0 %1110, %v273
        %v1112 = vpop.permute.xlu0 %1111
        %1114 = vset.pattern.permute.xlu0 2
        %1115 = vperm.xlu0 %1114, %v274
        %v1116 = vpop.permute.xlu0 %1115
        %1118 = vset.pattern.permute.xlu0 2
        %1119 = vperm.xlu0 %1118, %v275
        %v1120 = vpop.permute.xlu0 %1119
        %1122 = vset.pattern.permute.xlu0 2
        %1123 = vperm.xlu0 %1122, %v276
        %v1124 = vpop.permute.xlu0 %1123
        %1126 = vset.pattern.permute.xlu0 2
        %1127 = vperm.xlu0 %1126, %v277
        %v1128 = vpop.permute.xlu0 %1127
        %1130 = vset.pattern.permute.xlu0 2
        %1131 = vperm.xlu0 %1130, %v278
        %v1132 = vpop.permute.xlu0 %1131
        %1134 = vset.pattern.permute.xlu0 2
        %1135 = vperm.xlu0 %1134, %v279
        %v1136 = vpop.permute.xlu0 %1135
        %1138 = vset.pattern.permute.xlu0 2
        %1139 = vperm.xlu0 %1138, %v280
        %v1140 = vpop.permute.xlu0 %1139
        %1142 = vset.pattern.permute.xlu0 2
        %1143 = vperm.xlu0 %1142, %v281
        %v1144 = vpop.permute.xlu0 %1143
        %1146 = vset.pattern.permute.xlu0 2
        %1147 = vperm.xlu0 %1146, %v282
        %v1148 = vpop.permute.xlu0 %1147
        %1150 = vset.pattern.permute.xlu0 2
        %1151 = vperm.xlu0 %1150, %v283
        %v1152 = vpop.permute.xlu0 %1151
        %1154 = vset.pattern.permute.xlu0 2
        %1155 = vperm.xlu0 %1154, %v284
        %v1156 = vpop.permute.xlu0 %1155
        %1158 = vset.pattern.permute.xlu0 2
        %1159 = vperm.xlu0 %1158, %v285
        %v1160 = vpop.permute.xlu0 %1159
        %1162 = vset.pattern.permute.xlu0 2
        %1163 = vperm.xlu0 %1162, %v286
        %v1164 = vpop.permute.xlu0 %1163
        %1166 = vset.pattern.permute.xlu0 2
        %1167 = vperm.xlu0 %1166, %v287
        %v1168 = vpop.permute.xlu0 %1167
        %1170 = vset.pattern.permute.xlu0 2
        %1171 = vperm.xlu0 %1170, %v288
        %v1172 = vpop.permute.xlu0 %1171
        %1174 = vset.pattern.permute.xlu0 2
        %1175 = vperm.xlu0 %1174, %v289
        %v1176 = vpop.permute.xlu0 %1175
        %1178 = vset.pattern.permute.xlu0 2
        %1179 = vperm.xlu0 %1178, %v290
        %v1180 = vpop.permute.xlu0 %1179
        %1182 = vset.pattern.permute.xlu0 2
        %1183 = vperm.xlu0 %1182, %v291
        %v1184 = vpop.permute.xlu0 %1183
        %1186 = vset.pattern.permute.xlu0 2
        %1187 = vperm.xlu0 %1186, %v292
        %v1188 = vpop.permute.xlu0 %1187
        %1190 = vset.pattern.permute.xlu0 2
        %1191 = vperm.xlu0 %1190, %v293
        %v1192 = vpop.permute.xlu0 %1191
        %1194 = vset.pattern.permute.xlu0 2
        %1195 = vperm.xlu0 %1194, %v294
        %v1196 = vpop.permute.xlu0 %1195
        %1198 = vset.pattern.permute.xlu0 2
        %1199 = vperm.xlu0 %1198, %v295
        %v1200 = vpop.permute.xlu0 %1199
        %1202 = vset.pattern.permute.xlu0 2
        %1203 = vperm.xlu0 %1202, %v296
        %v1204 = vpop.permute.xlu0 %1203
        %1206 = vset.pattern.permute.xlu0 2
        %1207 = vperm.xlu0 %1206, %v297
        %v1208 = vpop.permute.xlu0 %1207
        %1210 = vset.pattern.permute.xlu0 2
        %1211 = vperm.xlu0 %1210, %v298
        %v1212 = vpop.permute.xlu0 %1211
        %1214 = vset.pattern.permute.xlu0 2
        %1215 = vperm.xlu0 %1214, %v299
        %v1216 = vpop.permute.xlu0 %1215
        %1218 = vset.pattern.permute.xlu0 2
        %1219 = vperm.xlu0 %1218, %v300
        %v1220 = vpop.permute.xlu0 %1219
        %1222 = vset.pattern.permute.xlu0 2
        %1223 = vperm.xlu0 %1222, %v301
        %v1224 = vpop.permute.xlu0 %1223
        %1226 = vset.pattern.permute.xlu0 2
        %1227 = vperm.xlu0 %1226, %v302
        %v1228 = vpop.permute.xlu0 %1227
        %1230 = vset.pattern.permute.xlu0 2
        %1231 = vperm.xlu0 %1230, %v303
        %v1232 = vpop.permute.xlu0 %1231
        %1234 = vset.pattern.permute.xlu0 2
        %1235 = vperm.xlu0 %1234, %v304
        %v1236 = vpop.permute.xlu0 %1235
        %1238 = vset.pattern.permute.xlu0 2
        %1239 = vperm.xlu0 %1238, %v305
        %v1240 = vpop.permute.xlu0 %1239
        %1242 = vset.pattern.permute.xlu0 2
        %1243 = vperm.xlu0 %1242, %v306
        %v1244 = vpop.permute.xlu0 %1243
        %1246 = vset.pattern.permute.xlu0 2
        %1247 = vperm.xlu0 %1246, %v307
        %v1248 = vpop.permute.xlu0 %1247
        %1250 = vset.pattern.permute.xlu0 2
        %1251 = vperm.xlu0 %1250, %v308
        %v1252 = vpop.permute.xlu0 %1251
        %1254 = vset.pattern.permute.xlu0 2
        %1255 = vperm.xlu0 %1254, %v309
        %v1256 = vpop.permute.xlu0 %1255
        %1258 = vset.pattern.permute.xlu0 2
        %1259 = vperm.xlu0 %1258, %v310
        %v1260 = vpop.permute.xlu0 %1259
        %1262 = vset.pattern.permute.xlu0 2
        %1263 = vperm.xlu0 %1262, %v311
        %v1264 = vpop.permute.xlu0 %1263
        %1266 = vset.pattern.permute.xlu0 2
        %1267 = vperm.xlu0 %1266, %v312
        %v1268 = vpop.permute.xlu0 %1267
        %1270 = vset.pattern.permute.xlu0 2
        %1271 = vperm.xlu0 %1270, %v313
        %v1272 = vpop.permute.xlu0 %1271
        %v1274 = vmul.f32 %v1020, %v186
        %v1275 = vmul.f32 %v1024, %v187
        %v1276 = vmul.f32 %v1028, %v188
        %v1277 = vmul.f32 %v1032, %v189
        %v1278 = vmul.f32 %v1036, %v190
        %v1279 = vmul.f32 %v1040, %v191
        %v1280 = vmul.f32 %v1044, %v192
        %v1281 = vmul.f32 %v1048, %v193
        %v1282 = vmul.f32 %v1052, %v194
        %v1283 = vmul.f32 %v1056, %v195
        %v1284 = vmul.f32 %v1060, %v196
        %v1285 = vmul.f32 %v1064, %v197
        %v1286 = vmul.f32 %v1068, %v198
        %v1287 = vmul.f32 %v1072, %v199
        %v1288 = vmul.f32 %v1076, %v200
        %v1289 = vmul.f32 %v1080, %v201
        %v1290 = vmul.f32 %v1084, %v202
        %v1291 = vmul.f32 %v1088, %v203
        %v1292 = vmul.f32 %v1092, %v204
        %v1293 = vmul.f32 %v1096, %v205
        %v1294 = vmul.f32 %v1100, %v206
        %v1295 = vmul.f32 %v1104, %v207
        %v1296 = vmul.f32 %v1108, %v208
        %v1297 = vmul.f32 %v1112, %v209
        %v1298 = vmul.f32 %v1116, %v210
        %v1299 = vmul.f32 %v1120, %v211
        %v1300 = vmul.f32 %v1124, %v212
        %v1301 = vmul.f32 %v1128, %v213
        %v1302 = vmul.f32 %v1132, %v214
        %v1303 = vmul.f32 %v1136, %v215
        %v1304 = vmul.f32 %v1140, %v216
        %v1305 = vmul.f32 %v1144, %v217
        %v1306 = vmul.f32 %v1148, %v218
        %v1307 = vmul.f32 %v1152, %v219
        %v1308 = vmul.f32 %v1156, %v220
        %v1309 = vmul.f32 %v1160, %v221
        %v1310 = vmul.f32 %v1164, %v222
        %v1311 = vmul.f32 %v1168, %v223
        %v1312 = vmul.f32 %v1172, %v224
        %v1313 = vmul.f32 %v1176, %v225
        %v1314 = vmul.f32 %v1180, %v226
        %v1315 = vmul.f32 %v1184, %v227
        %v1316 = vmul.f32 %v1188, %v228
        %v1317 = vmul.f32 %v1192, %v229
        %v1318 = vmul.f32 %v1196, %v230
        %v1319 = vmul.f32 %v1200, %v231
        %v1320 = vmul.f32 %v1204, %v232
        %v1321 = vmul.f32 %v1208, %v233
        %v1322 = vmul.f32 %v1212, %v234
        %v1323 = vmul.f32 %v1216, %v235
        %v1324 = vmul.f32 %v1220, %v236
        %v1325 = vmul.f32 %v1224, %v237
        %v1326 = vmul.f32 %v1228, %v238
        %v1327 = vmul.f32 %v1232, %v239
        %v1328 = vmul.f32 %v1236, %v240
        %v1329 = vmul.f32 %v1240, %v241
        %v1330 = vmul.f32 %v1244, %v242
        %v1331 = vmul.f32 %v1248, %v243
        %v1332 = vmul.f32 %v1252, %v244
        %v1333 = vmul.f32 %v1256, %v245
        %v1334 = vmul.f32 %v1260, %v246
        %v1335 = vmul.f32 %v1264, %v247
        %v1336 = vmul.f32 %v1268, %v248
        %v1337 = vmul.f32 %v1272, %v249
        %1338 = vset.pattern.permute.xlu0 3
        %1339 = vperm.xlu0 %1338, %v250
        %v1340 = vpop.permute.xlu0 %1339
        %1342 = vset.pattern.permute.xlu0 3
        %1343 = vperm.xlu0 %1342, %v251
        %v1344 = vpop.permute.xlu0 %1343
        %1346 = vset.pattern.permute.xlu0 3
        %1347 = vperm.xlu0 %1346, %v252
        %v1348 = vpop.permute.xlu0 %1347
        %1350 = vset.pattern.permute.xlu0 3
        %1351 = vperm.xlu0 %1350, %v253
        %v1352 = vpop.permute.xlu0 %1351
        %1354 = vset.pattern.permute.xlu0 3
        %1355 = vperm.xlu0 %1354, %v254
        %v1356 = vpop.permute.xlu0 %1355
        %1358 = vset.pattern.permute.xlu0 3
        %1359 = vperm.xlu0 %1358, %v255
        %v1360 = vpop.permute.xlu0 %1359
        %1362 = vset.pattern.permute.xlu0 3
        %1363 = vperm.xlu0 %1362, %v256
        %v1364 = vpop.permute.xlu0 %1363
        %1366 = vset.pattern.permute.xlu0 3
        %1367 = vperm.xlu0 %1366, %v257
        %v1368 = vpop.permute.xlu0 %1367
        %1370 = vset.pattern.permute.xlu0 3
        %1371 = vperm.xlu0 %1370, %v258
        %v1372 = vpop.permute.xlu0 %1371
        %1374 = vset.pattern.permute.xlu0 3
        %1375 = vperm.xlu0 %1374, %v259
        %v1376 = vpop.permute.xlu0 %1375
        %1378 = vset.pattern.permute.xlu0 3
        %1379 = vperm.xlu0 %1378, %v260
        %v1380 = vpop.permute.xlu0 %1379
        %1382 = vset.pattern.permute.xlu0 3
        %1383 = vperm.xlu0 %1382, %v261
        %v1384 = vpop.permute.xlu0 %1383
        %1386 = vset.pattern.permute.xlu0 3
        %1387 = vperm.xlu0 %1386, %v262
        %v1388 = vpop.permute.xlu0 %1387
        %1390 = vset.pattern.permute.xlu0 3
        %1391 = vperm.xlu0 %1390, %v263
        %v1392 = vpop.permute.xlu0 %1391
        %1394 = vset.pattern.permute.xlu0 3
        %1395 = vperm.xlu0 %1394, %v264
        %v1396 = vpop.permute.xlu0 %1395
        %1398 = vset.pattern.permute.xlu0 3
        %1399 = vperm.xlu0 %1398, %v265
        %v1400 = vpop.permute.xlu0 %1399
        %1402 = vset.pattern.permute.xlu0 3
        %1403 = vperm.xlu0 %1402, %v266
        %v1404 = vpop.permute.xlu0 %1403
        %1406 = vset.pattern.permute.xlu0 3
        %1407 = vperm.xlu0 %1406, %v267
        %v1408 = vpop.permute.xlu0 %1407
        %1410 = vset.pattern.permute.xlu0 3
        %1411 = vperm.xlu0 %1410, %v268
        %v1412 = vpop.permute.xlu0 %1411
        %1414 = vset.pattern.permute.xlu0 3
        %1415 = vperm.xlu0 %1414, %v269
        %v1416 = vpop.permute.xlu0 %1415
        %1418 = vset.pattern.permute.xlu0 3
        %1419 = vperm.xlu0 %1418, %v270
        %v1420 = vpop.permute.xlu0 %1419
        %1422 = vset.pattern.permute.xlu0 3
        %1423 = vperm.xlu0 %1422, %v271
        %v1424 = vpop.permute.xlu0 %1423
        %1426 = vset.pattern.permute.xlu0 3
        %1427 = vperm.xlu0 %1426, %v272
        %v1428 = vpop.permute.xlu0 %1427
        %1430 = vset.pattern.permute.xlu0 3
        %1431 = vperm.xlu0 %1430, %v273
        %v1432 = vpop.permute.xlu0 %1431
        %1434 = vset.pattern.permute.xlu0 3
        %1435 = vperm.xlu0 %1434, %v274
        %v1436 = vpop.permute.xlu0 %1435
        %1438 = vset.pattern.permute.xlu0 3
        %1439 = vperm.xlu0 %1438, %v275
        %v1440 = vpop.permute.xlu0 %1439
        %1442 = vset.pattern.permute.xlu0 3
        %1443 = vperm.xlu0 %1442, %v276
        %v1444 = vpop.permute.xlu0 %1443
        %1446 = vset.pattern.permute.xlu0 3
        %1447 = vperm.xlu0 %1446, %v277
        %v1448 = vpop.permute.xlu0 %1447
        %1450 = vset.pattern.permute.xlu0 3
        %1451 = vperm.xlu0 %1450, %v278
        %v1452 = vpop.permute.xlu0 %1451
        %1454 = vset.pattern.permute.xlu0 3
        %1455 = vperm.xlu0 %1454, %v279
        %v1456 = vpop.permute.xlu0 %1455
        %1458 = vset.pattern.permute.xlu0 3
        %1459 = vperm.xlu0 %1458, %v280
        %v1460 = vpop.permute.xlu0 %1459
        %1462 = vset.pattern.permute.xlu0 3
        %1463 = vperm.xlu0 %1462, %v281
        %v1464 = vpop.permute.xlu0 %1463
        %1466 = vset.pattern.permute.xlu0 3
        %1467 = vperm.xlu0 %1466, %v282
        %v1468 = vpop.permute.xlu0 %1467
        %1470 = vset.pattern.permute.xlu0 3
        %1471 = vperm.xlu0 %1470, %v283
        %v1472 = vpop.permute.xlu0 %1471
        %1474 = vset.pattern.permute.xlu0 3
        %1475 = vperm.xlu0 %1474, %v284
        %v1476 = vpop.permute.xlu0 %1475
        %1478 = vset.pattern.permute.xlu0 3
        %1479 = vperm.xlu0 %1478, %v285
        %v1480 = vpop.permute.xlu0 %1479
        %1482 = vset.pattern.permute.xlu0 3
        %1483 = vperm.xlu0 %1482, %v286
        %v1484 = vpop.permute.xlu0 %1483
        %1486 = vset.pattern.permute.xlu0 3
        %1487 = vperm.xlu0 %1486, %v287
        %v1488 = vpop.permute.xlu0 %1487
        %1490 = vset.pattern.permute.xlu0 3
        %1491 = vperm.xlu0 %1490, %v288
        %v1492 = vpop.permute.xlu0 %1491
        %1494 = vset.pattern.permute.xlu0 3
        %1495 = vperm.xlu0 %1494, %v289
        %v1496 = vpop.permute.xlu0 %1495
        %1498 = vset.pattern.permute.xlu0 3
        %1499 = vperm.xlu0 %1498, %v290
        %v1500 = vpop.permute.xlu0 %1499
        %1502 = vset.pattern.permute.xlu0 3
        %1503 = vperm.xlu0 %1502, %v291
        %v1504 = vpop.permute.xlu0 %1503
        %1506 = vset.pattern.permute.xlu0 3
        %1507 = vperm.xlu0 %1506, %v292
        %v1508 = vpop.permute.xlu0 %1507
        %1510 = vset.pattern.permute.xlu0 3
        %1511 = vperm.xlu0 %1510, %v293
        %v1512 = vpop.permute.xlu0 %1511
        %1514 = vset.pattern.permute.xlu0 3
        %1515 = vperm.xlu0 %1514, %v294
        %v1516 = vpop.permute.xlu0 %1515
        %1518 = vset.pattern.permute.xlu0 3
        %1519 = vperm.xlu0 %1518, %v295
        %v1520 = vpop.permute.xlu0 %1519
        %1522 = vset.pattern.permute.xlu0 3
        %1523 = vperm.xlu0 %1522, %v296
        %v1524 = vpop.permute.xlu0 %1523
        %1526 = vset.pattern.permute.xlu0 3
        %1527 = vperm.xlu0 %1526, %v297
        %v1528 = vpop.permute.xlu0 %1527
        %1530 = vset.pattern.permute.xlu0 3
        %1531 = vperm.xlu0 %1530, %v298
        %v1532 = vpop.permute.xlu0 %1531
        %1534 = vset.pattern.permute.xlu0 3
        %1535 = vperm.xlu0 %1534, %v299
        %v1536 = vpop.permute.xlu0 %1535
        %1538 = vset.pattern.permute.xlu0 3
        %1539 = vperm.xlu0 %1538, %v300
        %v1540 = vpop.permute.xlu0 %1539
        %1542 = vset.pattern.permute.xlu0 3
        %1543 = vperm.xlu0 %1542, %v301
        %v1544 = vpop.permute.xlu0 %1543
        %1546 = vset.pattern.permute.xlu0 3
        %1547 = vperm.xlu0 %1546, %v302
        %v1548 = vpop.permute.xlu0 %1547
        %1550 = vset.pattern.permute.xlu0 3
        %1551 = vperm.xlu0 %1550, %v303
        %v1552 = vpop.permute.xlu0 %1551
        %1554 = vset.pattern.permute.xlu0 3
        %1555 = vperm.xlu0 %1554, %v304
        %v1556 = vpop.permute.xlu0 %1555
        %1558 = vset.pattern.permute.xlu0 3
        %1559 = vperm.xlu0 %1558, %v305
        %v1560 = vpop.permute.xlu0 %1559
        %1562 = vset.pattern.permute.xlu0 3
        %1563 = vperm.xlu0 %1562, %v306
        %v1564 = vpop.permute.xlu0 %1563
        %1566 = vset.pattern.permute.xlu0 3
        %1567 = vperm.xlu0 %1566, %v307
        %v1568 = vpop.permute.xlu0 %1567
        %1570 = vset.pattern.permute.xlu0 3
        %1571 = vperm.xlu0 %1570, %v308
        %v1572 = vpop.permute.xlu0 %1571
        %1574 = vset.pattern.permute.xlu0 3
        %1575 = vperm.xlu0 %1574, %v309
        %v1576 = vpop.permute.xlu0 %1575
        %1578 = vset.pattern.permute.xlu0 3
        %1579 = vperm.xlu0 %1578, %v310
        %v1580 = vpop.permute.xlu0 %1579
        %1582 = vset.pattern.permute.xlu0 3
        %1583 = vperm.xlu0 %1582, %v311
        %v1584 = vpop.permute.xlu0 %1583
        %1586 = vset.pattern.permute.xlu0 3
        %1587 = vperm.xlu0 %1586, %v312
        %v1588 = vpop.permute.xlu0 %1587
        %1590 = vset.pattern.permute.xlu0 3
        %1591 = vperm.xlu0 %1590, %v313
        %v1592 = vpop.permute.xlu0 %1591
        %v1594 = vmul.f32 %v1340, %v186
        %v1595 = vmul.f32 %v1344, %v187
        %v1596 = vmul.f32 %v1348, %v188
        %v1597 = vmul.f32 %v1352, %v189
        %v1598 = vmul.f32 %v1356, %v190
        %v1599 = vmul.f32 %v1360, %v191
        %v1600 = vmul.f32 %v1364, %v192
        %v1601 = vmul.f32 %v1368, %v193
        %v1602 = vmul.f32 %v1372, %v194
        %v1603 = vmul.f32 %v1376, %v195
        %v1604 = vmul.f32 %v1380, %v196
        %v1605 = vmul.f32 %v1384, %v197
        %v1606 = vmul.f32 %v1388, %v198
        %v1607 = vmul.f32 %v1392, %v199
        %v1608 = vmul.f32 %v1396, %v200
        %v1609 = vmul.f32 %v1400, %v201
        %v1610 = vmul.f32 %v1404, %v202
        %v1611 = vmul.f32 %v1408, %v203
        %v1612 = vmul.f32 %v1412, %v204
        %v1613 = vmul.f32 %v1416, %v205
        %v1614 = vmul.f32 %v1420, %v206
        %v1615 = vmul.f32 %v1424, %v207
        %v1616 = vmul.f32 %v1428, %v208
        %v1617 = vmul.f32 %v1432, %v209
        %v1618 = vmul.f32 %v1436, %v210
        %v1619 = vmul.f32 %v1440, %v211
        %v1620 = vmul.f32 %v1444, %v212
        %v1621 = vmul.f32 %v1448, %v213
        %v1622 = vmul.f32 %v1452, %v214
        %v1623 = vmul.f32 %v1456, %v215
        %v1624 = vmul.f32 %v1460, %v216
        %v1625 = vmul.f32 %v1464, %v217
        %v1626 = vmul.f32 %v1468, %v218
        %v1627 = vmul.f32 %v1472, %v219
        %v1628 = vmul.f32 %v1476, %v220
        %v1629 = vmul.f32 %v1480, %v221
        %v1630 = vmul.f32 %v1484, %v222
        %v1631 = vmul.f32 %v1488, %v223
        %v1632 = vmul.f32 %v1492, %v224
        %v1633 = vmul.f32 %v1496, %v225
        %v1634 = vmul.f32 %v1500, %v226
        %v1635 = vmul.f32 %v1504, %v227
        %v1636 = vmul.f32 %v1508, %v228
        %v1637 = vmul.f32 %v1512, %v229
        %v1638 = vmul.f32 %v1516, %v230
        %v1639 = vmul.f32 %v1520, %v231
        %v1640 = vmul.f32 %v1524, %v232
        %v1641 = vmul.f32 %v1528, %v233
        %v1642 = vmul.f32 %v1532, %v234
        %v1643 = vmul.f32 %v1536, %v235
        %v1644 = vmul.f32 %v1540, %v236
        %v1645 = vmul.f32 %v1544, %v237
        %v1646 = vmul.f32 %v1548, %v238
        %v1647 = vmul.f32 %v1552, %v239
        %v1648 = vmul.f32 %v1556, %v240
        %v1649 = vmul.f32 %v1560, %v241
        %v1650 = vmul.f32 %v1564, %v242
        %v1651 = vmul.f32 %v1568, %v243
        %v1652 = vmul.f32 %v1572, %v244
        %v1653 = vmul.f32 %v1576, %v245
        %v1654 = vmul.f32 %v1580, %v246
        %v1655 = vmul.f32 %v1584, %v247
        %v1656 = vmul.f32 %v1588, %v248
        %v1657 = vmul.f32 %v1592, %v249
        %1658 = vset.pattern.permute.xlu0 4
        %1659 = vperm.xlu0 %1658, %v250
        %v1660 = vpop.permute.xlu0 %1659
        %1662 = vset.pattern.permute.xlu0 4
        %1663 = vperm.xlu0 %1662, %v251
        %v1664 = vpop.permute.xlu0 %1663
        %1666 = vset.pattern.permute.xlu0 4
        %1667 = vperm.xlu0 %1666, %v252
        %v1668 = vpop.permute.xlu0 %1667
        %1670 = vset.pattern.permute.xlu0 4
        %1671 = vperm.xlu0 %1670, %v253
        %v1672 = vpop.permute.xlu0 %1671
        %1674 = vset.pattern.permute.xlu0 4
        %1675 = vperm.xlu0 %1674, %v254
        %v1676 = vpop.permute.xlu0 %1675
        %1678 = vset.pattern.permute.xlu0 4
        %1679 = vperm.xlu0 %1678, %v255
        %v1680 = vpop.permute.xlu0 %1679
        %1682 = vset.pattern.permute.xlu0 4
        %1683 = vperm.xlu0 %1682, %v256
        %v1684 = vpop.permute.xlu0 %1683
        %1686 = vset.pattern.permute.xlu0 4
        %1687 = vperm.xlu0 %1686, %v257
        %v1688 = vpop.permute.xlu0 %1687
        %1690 = vset.pattern.permute.xlu0 4
        %1691 = vperm.xlu0 %1690, %v258
        %v1692 = vpop.permute.xlu0 %1691
        %1694 = vset.pattern.permute.xlu0 4
        %1695 = vperm.xlu0 %1694, %v259
        %v1696 = vpop.permute.xlu0 %1695
        %1698 = vset.pattern.permute.xlu0 4
        %1699 = vperm.xlu0 %1698, %v260
        %v1700 = vpop.permute.xlu0 %1699
        %1702 = vset.pattern.permute.xlu0 4
        %1703 = vperm.xlu0 %1702, %v261
        %v1704 = vpop.permute.xlu0 %1703
        %1706 = vset.pattern.permute.xlu0 4
        %1707 = vperm.xlu0 %1706, %v262
        %v1708 = vpop.permute.xlu0 %1707
        %1710 = vset.pattern.permute.xlu0 4
        %1711 = vperm.xlu0 %1710, %v263
        %v1712 = vpop.permute.xlu0 %1711
        %1714 = vset.pattern.permute.xlu0 4
        %1715 = vperm.xlu0 %1714, %v264
        %v1716 = vpop.permute.xlu0 %1715
        %1718 = vset.pattern.permute.xlu0 4
        %1719 = vperm.xlu0 %1718, %v265
        %v1720 = vpop.permute.xlu0 %1719
        %1722 = vset.pattern.permute.xlu0 4
        %1723 = vperm.xlu0 %1722, %v266
        %v1724 = vpop.permute.xlu0 %1723
        %1726 = vset.pattern.permute.xlu0 4
        %1727 = vperm.xlu0 %1726, %v267
        %v1728 = vpop.permute.xlu0 %1727
        %1730 = vset.pattern.permute.xlu0 4
        %1731 = vperm.xlu0 %1730, %v268
        %v1732 = vpop.permute.xlu0 %1731
        %1734 = vset.pattern.permute.xlu0 4
        %1735 = vperm.xlu0 %1734, %v269
        %v1736 = vpop.permute.xlu0 %1735
        %1738 = vset.pattern.permute.xlu0 4
        %1739 = vperm.xlu0 %1738, %v270
        %v1740 = vpop.permute.xlu0 %1739
        %1742 = vset.pattern.permute.xlu0 4
        %1743 = vperm.xlu0 %1742, %v271
        %v1744 = vpop.permute.xlu0 %1743
        %1746 = vset.pattern.permute.xlu0 4
        %1747 = vperm.xlu0 %1746, %v272
        %v1748 = vpop.permute.xlu0 %1747
        %1750 = vset.pattern.permute.xlu0 4
        %1751 = vperm.xlu0 %1750, %v273
        %v1752 = vpop.permute.xlu0 %1751
        %1754 = vset.pattern.permute.xlu0 4
        %1755 = vperm.xlu0 %1754, %v274
        %v1756 = vpop.permute.xlu0 %1755
        %1758 = vset.pattern.permute.xlu0 4
        %1759 = vperm.xlu0 %1758, %v275
        %v1760 = vpop.permute.xlu0 %1759
        %1762 = vset.pattern.permute.xlu0 4
        %1763 = vperm.xlu0 %1762, %v276
        %v1764 = vpop.permute.xlu0 %1763
        %1766 = vset.pattern.permute.xlu0 4
        %1767 = vperm.xlu0 %1766, %v277
        %v1768 = vpop.permute.xlu0 %1767
        %1770 = vset.pattern.permute.xlu0 4
        %1771 = vperm.xlu0 %1770, %v278
        %v1772 = vpop.permute.xlu0 %1771
        %1774 = vset.pattern.permute.xlu0 4
        %1775 = vperm.xlu0 %1774, %v279
        %v1776 = vpop.permute.xlu0 %1775
        %1778 = vset.pattern.permute.xlu0 4
        %1779 = vperm.xlu0 %1778, %v280
        %v1780 = vpop.permute.xlu0 %1779
        %1782 = vset.pattern.permute.xlu0 4
        %1783 = vperm.xlu0 %1782, %v281
        %v1784 = vpop.permute.xlu0 %1783
        %1786 = vset.pattern.permute.xlu0 4
        %1787 = vperm.xlu0 %1786, %v282
        %v1788 = vpop.permute.xlu0 %1787
        %1790 = vset.pattern.permute.xlu0 4
        %1791 = vperm.xlu0 %1790, %v283
        %v1792 = vpop.permute.xlu0 %1791
        %1794 = vset.pattern.permute.xlu0 4
        %1795 = vperm.xlu0 %1794, %v284
        %v1796 = vpop.permute.xlu0 %1795
        %1798 = vset.pattern.permute.xlu0 4
        %1799 = vperm.xlu0 %1798, %v285
        %v1800 = vpop.permute.xlu0 %1799
        %1802 = vset.pattern.permute.xlu0 4
        %1803 = vperm.xlu0 %1802, %v286
        %v1804 = vpop.permute.xlu0 %1803
        %1806 = vset.pattern.permute.xlu0 4
        %1807 = vperm.xlu0 %1806, %v287
        %v1808 = vpop.permute.xlu0 %1807
        %1810 = vset.pattern.permute.xlu0 4
        %1811 = vperm.xlu0 %1810, %v288
        %v1812 = vpop.permute.xlu0 %1811
        %1814 = vset.pattern.permute.xlu0 4
        %1815 = vperm.xlu0 %1814, %v289
        %v1816 = vpop.permute.xlu0 %1815
        %1818 = vset.pattern.permute.xlu0 4
        %1819 = vperm.xlu0 %1818, %v290
        %v1820 = vpop.permute.xlu0 %1819
        %1822 = vset.pattern.permute.xlu0 4
        %1823 = vperm.xlu0 %1822, %v291
        %v1824 = vpop.permute.xlu0 %1823
        %1826 = vset.pattern.permute.xlu0 4
        %1827 = vperm.xlu0 %1826, %v292
        %v1828 = vpop.permute.xlu0 %1827
        %1830 = vset.pattern.permute.xlu0 4
        %1831 = vperm.xlu0 %1830, %v293
        %v1832 = vpop.permute.xlu0 %1831
        %1834 = vset.pattern.permute.xlu0 4
        %1835 = vperm.xlu0 %1834, %v294
        %v1836 = vpop.permute.xlu0 %1835
        %1838 = vset.pattern.permute.xlu0 4
        %1839 = vperm.xlu0 %1838, %v295
        %v1840 = vpop.permute.xlu0 %1839
        %1842 = vset.pattern.permute.xlu0 4
        %1843 = vperm.xlu0 %1842, %v296
        %v1844 = vpop.permute.xlu0 %1843
        %1846 = vset.pattern.permute.xlu0 4
        %1847 = vperm.xlu0 %1846, %v297
        %v1848 = vpop.permute.xlu0 %1847
        %1850 = vset.pattern.permute.xlu0 4
        %1851 = vperm.xlu0 %1850, %v298
        %v1852 = vpop.permute.xlu0 %1851
        %1854 = vset.pattern.permute.xlu0 4
        %1855 = vperm.xlu0 %1854, %v299
        %v1856 = vpop.permute.xlu0 %1855
        %1858 = vset.pattern.permute.xlu0 4
        %1859 = vperm.xlu0 %1858, %v300
        %v1860 = vpop.permute.xlu0 %1859
        %1862 = vset.pattern.permute.xlu0 4
        %1863 = vperm.xlu0 %1862, %v301
        %v1864 = vpop.permute.xlu0 %1863
        %1866 = vset.pattern.permute.xlu0 4
        %1867 = vperm.xlu0 %1866, %v302
        %v1868 = vpop.permute.xlu0 %1867
        %1870 = vset.pattern.permute.xlu0 4
        %1871 = vperm.xlu0 %1870, %v303
        %v1872 = vpop.permute.xlu0 %1871
        %1874 = vset.pattern.permute.xlu0 4
        %1875 = vperm.xlu0 %1874, %v304
        %v1876 = vpop.permute.xlu0 %1875
        %1878 = vset.pattern.permute.xlu0 4
        %1879 = vperm.xlu0 %1878, %v305
        %v1880 = vpop.permute.xlu0 %1879
        %1882 = vset.pattern.permute.xlu0 4
        %1883 = vperm.xlu0 %1882, %v306
        %v1884 = vpop.permute.xlu0 %1883
        %1886 = vset.pattern.permute.xlu0 4
        %1887 = vperm.xlu0 %1886, %v307
        %v1888 = vpop.permute.xlu0 %1887
        %1890 = vset.pattern.permute.xlu0 4
        %1891 = vperm.xlu0 %1890, %v308
        %v1892 = vpop.permute.xlu0 %1891
        %1894 = vset.pattern.permute.xlu0 4
        %1895 = vperm.xlu0 %1894, %v309
        %v1896 = vpop.permute.xlu0 %1895
        %1898 = vset.pattern.permute.xlu0 4
        %1899 = vperm.xlu0 %1898, %v310
        %v1900 = vpop.permute.xlu0 %1899
        %1902 = vset.pattern.permute.xlu0 4
        %1903 = vperm.xlu0 %1902, %v311
        %v1904 = vpop.permute.xlu0 %1903
        %1906 = vset.pattern.permute.xlu0 4
        %1907 = vperm.xlu0 %1906, %v312
        %v1908 = vpop.permute.xlu0 %1907
        %1910 = vset.pattern.permute.xlu0 4
        %1911 = vperm.xlu0 %1910, %v313
        %v1912 = vpop.permute.xlu0 %1911
        %v1914 = vmul.f32 %v1660, %v186
        %v1915 = vmul.f32 %v1664, %v187
        %v1916 = vmul.f32 %v1668, %v188
        %v1917 = vmul.f32 %v1672, %v189
        %v1918 = vmul.f32 %v1676, %v190
        %v1919 = vmul.f32 %v1680, %v191
        %v1920 = vmul.f32 %v1684, %v192
        %v1921 = vmul.f32 %v1688, %v193
        %v1922 = vmul.f32 %v1692, %v194
        %v1923 = vmul.f32 %v1696, %v195
        %v1924 = vmul.f32 %v1700, %v196
        %v1925 = vmul.f32 %v1704, %v197
        %v1926 = vmul.f32 %v1708, %v198
        %v1927 = vmul.f32 %v1712, %v199
        %v1928 = vmul.f32 %v1716, %v200
        %v1929 = vmul.f32 %v1720, %v201
        %v1930 = vmul.f32 %v1724, %v202
        %v1931 = vmul.f32 %v1728, %v203
        %v1932 = vmul.f32 %v1732, %v204
        %v1933 = vmul.f32 %v1736, %v205
        %v1934 = vmul.f32 %v1740, %v206
        %v1935 = vmul.f32 %v1744, %v207
        %v1936 = vmul.f32 %v1748, %v208
        %v1937 = vmul.f32 %v1752, %v209
        %v1938 = vmul.f32 %v1756, %v210
        %v1939 = vmul.f32 %v1760, %v211
        %v1940 = vmul.f32 %v1764, %v212
        %v1941 = vmul.f32 %v1768, %v213
        %v1942 = vmul.f32 %v1772, %v214
        %v1943 = vmul.f32 %v1776, %v215
        %v1944 = vmul.f32 %v1780, %v216
        %v1945 = vmul.f32 %v1784, %v217
        %v1946 = vmul.f32 %v1788, %v218
        %v1947 = vmul.f32 %v1792, %v219
        %v1948 = vmul.f32 %v1796, %v220
        %v1949 = vmul.f32 %v1800, %v221
        %v1950 = vmul.f32 %v1804, %v222
        %v1951 = vmul.f32 %v1808, %v223
        %v1952 = vmul.f32 %v1812, %v224
        %v1953 = vmul.f32 %v1816, %v225
        %v1954 = vmul.f32 %v1820, %v226
        %v1955 = vmul.f32 %v1824, %v227
        %v1956 = vmul.f32 %v1828, %v228
        %v1957 = vmul.f32 %v1832, %v229
        %v1958 = vmul.f32 %v1836, %v230
        %v1959 = vmul.f32 %v1840, %v231
        %v1960 = vmul.f32 %v1844, %v232
        %v1961 = vmul.f32 %v1848, %v233
        %v1962 = vmul.f32 %v1852, %v234
        %v1963 = vmul.f32 %v1856, %v235
        %v1964 = vmul.f32 %v1860, %v236
        %v1965 = vmul.f32 %v1864, %v237
        %v1966 = vmul.f32 %v1868, %v238
        %v1967 = vmul.f32 %v1872, %v239
        %v1968 = vmul.f32 %v1876, %v240
        %v1969 = vmul.f32 %v1880, %v241
        %v1970 = vmul.f32 %v1884, %v242
        %v1971 = vmul.f32 %v1888, %v243
        %v1972 = vmul.f32 %v1892, %v244
        %v1973 = vmul.f32 %v1896, %v245
        %v1974 = vmul.f32 %v1900, %v246
        %v1975 = vmul.f32 %v1904, %v247
        %v1976 = vmul.f32 %v1908, %v248
        %v1977 = vmul.f32 %v1912, %v249
        %1978 = vset.pattern.permute.xlu0 5
        %1979 = vperm.xlu0 %1978, %v250
        %v1980 = vpop.permute.xlu0 %1979
        %1982 = vset.pattern.permute.xlu0 5
        %1983 = vperm.xlu0 %1982, %v251
        %v1984 = vpop.permute.xlu0 %1983
        %1986 = vset.pattern.permute.xlu0 5
        %1987 = vperm.xlu0 %1986, %v252
        %v1988 = vpop.permute.xlu0 %1987
        %1990 = vset.pattern.permute.xlu0 5
        %1991 = vperm.xlu0 %1990, %v253
        %v1992 = vpop.permute.xlu0 %1991
        %1994 = vset.pattern.permute.xlu0 5
        %1995 = vperm.xlu0 %1994, %v254
        %v1996 = vpop.permute.xlu0 %1995
        %1998 = vset.pattern.permute.xlu0 5
        %1999 = vperm.xlu0 %1998, %v255
        %v2000 = vpop.permute.xlu0 %1999
        %2002 = vset.pattern.permute.xlu0 5
        %2003 = vperm.xlu0 %2002, %v256
        %v2004 = vpop.permute.xlu0 %2003
        %2006 = vset.pattern.permute.xlu0 5
        %2007 = vperm.xlu0 %2006, %v257
        %v2008 = vpop.permute.xlu0 %2007
        %2010 = vset.pattern.permute.xlu0 5
        %2011 = vperm.xlu0 %2010, %v258
        %v2012 = vpop.permute.xlu0 %2011
        %2014 = vset.pattern.permute.xlu0 5
        %2015 = vperm.xlu0 %2014, %v259
        %v2016 = vpop.permute.xlu0 %2015
        %2018 = vset.pattern.permute.xlu0 5
        %2019 = vperm.xlu0 %2018, %v260
        %v2020 = vpop.permute.xlu0 %2019
        %2022 = vset.pattern.permute.xlu0 5
        %2023 = vperm.xlu0 %2022, %v261
        %v2024 = vpop.permute.xlu0 %2023
        %2026 = vset.pattern.permute.xlu0 5
        %2027 = vperm.xlu0 %2026, %v262
        %v2028 = vpop.permute.xlu0 %2027
        %2030 = vset.pattern.permute.xlu0 5
        %2031 = vperm.xlu0 %2030, %v263
        %v2032 = vpop.permute.xlu0 %2031
        %2034 = vset.pattern.permute.xlu0 5
        %2035 = vperm.xlu0 %2034, %v264
        %v2036 = vpop.permute.xlu0 %2035
        %2038 = vset.pattern.permute.xlu0 5
        %2039 = vperm.xlu0 %2038, %v265
        %v2040 = vpop.permute.xlu0 %2039
        %2042 = vset.pattern.permute.xlu0 5
        %2043 = vperm.xlu0 %2042, %v266
        %v2044 = vpop.permute.xlu0 %2043
        %2046 = vset.pattern.permute.xlu0 5
        %2047 = vperm.xlu0 %2046, %v267
        %v2048 = vpop.permute.xlu0 %2047
        %2050 = vset.pattern.permute.xlu0 5
        %2051 = vperm.xlu0 %2050, %v268
        %v2052 = vpop.permute.xlu0 %2051
        %2054 = vset.pattern.permute.xlu0 5
        %2055 = vperm.xlu0 %2054, %v269
        %v2056 = vpop.permute.xlu0 %2055
        %2058 = vset.pattern.permute.xlu0 5
        %2059 = vperm.xlu0 %2058, %v270
        %v2060 = vpop.permute.xlu0 %2059
        %2062 = vset.pattern.permute.xlu0 5
        %2063 = vperm.xlu0 %2062, %v271
        %v2064 = vpop.permute.xlu0 %2063
        %2066 = vset.pattern.permute.xlu0 5
        %2067 = vperm.xlu0 %2066, %v272
        %v2068 = vpop.permute.xlu0 %2067
        %2070 = vset.pattern.permute.xlu0 5
        %2071 = vperm.xlu0 %2070, %v273
        %v2072 = vpop.permute.xlu0 %2071
        %2074 = vset.pattern.permute.xlu0 5
        %2075 = vperm.xlu0 %2074, %v274
        %v2076 = vpop.permute.xlu0 %2075
        %2078 = vset.pattern.permute.xlu0 5
        %2079 = vperm.xlu0 %2078, %v275
        %v2080 = vpop.permute.xlu0 %2079
        %2082 = vset.pattern.permute.xlu0 5
        %2083 = vperm.xlu0 %2082, %v276
        %v2084 = vpop.permute.xlu0 %2083
        %2086 = vset.pattern.permute.xlu0 5
        %2087 = vperm.xlu0 %2086, %v277
        %v2088 = vpop.permute.xlu0 %2087
        %2090 = vset.pattern.permute.xlu0 5
        %2091 = vperm.xlu0 %2090, %v278
        %v2092 = vpop.permute.xlu0 %2091
        %2094 = vset.pattern.permute.xlu0 5
        %2095 = vperm.xlu0 %2094, %v279
        %v2096 = vpop.permute.xlu0 %2095
        %2098 = vset.pattern.permute.xlu0 5
        %2099 = vperm.xlu0 %2098, %v280
        %v2100 = vpop.permute.xlu0 %2099
        %2102 = vset.pattern.permute.xlu0 5
        %2103 = vperm.xlu0 %2102, %v281
        %v2104 = vpop.permute.xlu0 %2103
        %2106 = vset.pattern.permute.xlu0 5
        %2107 = vperm.xlu0 %2106, %v282
        %v2108 = vpop.permute.xlu0 %2107
        %2110 = vset.pattern.permute.xlu0 5
        %2111 = vperm.xlu0 %2110, %v283
        %v2112 = vpop.permute.xlu0 %2111
        %2114 = vset.pattern.permute.xlu0 5
        %2115 = vperm.xlu0 %2114, %v284
        %v2116 = vpop.permute.xlu0 %2115
        %2118 = vset.pattern.permute.xlu0 5
        %2119 = vperm.xlu0 %2118, %v285
        %v2120 = vpop.permute.xlu0 %2119
        %2122 = vset.pattern.permute.xlu0 5
        %2123 = vperm.xlu0 %2122, %v286
        %v2124 = vpop.permute.xlu0 %2123
        %2126 = vset.pattern.permute.xlu0 5
        %2127 = vperm.xlu0 %2126, %v287
        %v2128 = vpop.permute.xlu0 %2127
        %2130 = vset.pattern.permute.xlu0 5
        %2131 = vperm.xlu0 %2130, %v288
        %v2132 = vpop.permute.xlu0 %2131
        %2134 = vset.pattern.permute.xlu0 5
        %2135 = vperm.xlu0 %2134, %v289
        %v2136 = vpop.permute.xlu0 %2135
        %2138 = vset.pattern.permute.xlu0 5
        %2139 = vperm.xlu0 %2138, %v290
        %v2140 = vpop.permute.xlu0 %2139
        %2142 = vset.pattern.permute.xlu0 5
        %2143 = vperm.xlu0 %2142, %v291
        %v2144 = vpop.permute.xlu0 %2143
        %2146 = vset.pattern.permute.xlu0 5
        %2147 = vperm.xlu0 %2146, %v292
        %v2148 = vpop.permute.xlu0 %2147
        %2150 = vset.pattern.permute.xlu0 5
        %2151 = vperm.xlu0 %2150, %v293
        %v2152 = vpop.permute.xlu0 %2151
        %2154 = vset.pattern.permute.xlu0 5
        %2155 = vperm.xlu0 %2154, %v294
        %v2156 = vpop.permute.xlu0 %2155
        %2158 = vset.pattern.permute.xlu0 5
        %2159 = vperm.xlu0 %2158, %v295
        %v2160 = vpop.permute.xlu0 %2159
        %2162 = vset.pattern.permute.xlu0 5
        %2163 = vperm.xlu0 %2162, %v296
        %v2164 = vpop.permute.xlu0 %2163
        %2166 = vset.pattern.permute.xlu0 5
        %2167 = vperm.xlu0 %2166, %v297
        %v2168 = vpop.permute.xlu0 %2167
        %2170 = vset.pattern.permute.xlu0 5
        %2171 = vperm.xlu0 %2170, %v298
        %v2172 = vpop.permute.xlu0 %2171
        %2174 = vset.pattern.permute.xlu0 5
        %2175 = vperm.xlu0 %2174, %v299
        %v2176 = vpop.permute.xlu0 %2175
        %2178 = vset.pattern.permute.xlu0 5
        %2179 = vperm.xlu0 %2178, %v300
        %v2180 = vpop.permute.xlu0 %2179
        %2182 = vset.pattern.permute.xlu0 5
        %2183 = vperm.xlu0 %2182, %v301
        %v2184 = vpop.permute.xlu0 %2183
        %2186 = vset.pattern.permute.xlu0 5
        %2187 = vperm.xlu0 %2186, %v302
        %v2188 = vpop.permute.xlu0 %2187
        %2190 = vset.pattern.permute.xlu0 5
        %2191 = vperm.xlu0 %2190, %v303
        %v2192 = vpop.permute.xlu0 %2191
        %2194 = vset.pattern.permute.xlu0 5
        %2195 = vperm.xlu0 %2194, %v304
        %v2196 = vpop.permute.xlu0 %2195
        %2198 = vset.pattern.permute.xlu0 5
        %2199 = vperm.xlu0 %2198, %v305
        %v2200 = vpop.permute.xlu0 %2199
        %2202 = vset.pattern.permute.xlu0 5
        %2203 = vperm.xlu0 %2202, %v306
        %v2204 = vpop.permute.xlu0 %2203
        %2206 = vset.pattern.permute.xlu0 5
        %2207 = vperm.xlu0 %2206, %v307
        %v2208 = vpop.permute.xlu0 %2207
        %2210 = vset.pattern.permute.xlu0 5
        %2211 = vperm.xlu0 %2210, %v308
        %v2212 = vpop.permute.xlu0 %2211
        %2214 = vset.pattern.permute.xlu0 5
        %2215 = vperm.xlu0 %2214, %v309
        %v2216 = vpop.permute.xlu0 %2215
        %2218 = vset.pattern.permute.xlu0 5
        %2219 = vperm.xlu0 %2218, %v310
        %v2220 = vpop.permute.xlu0 %2219
        %2222 = vset.pattern.permute.xlu0 5
        %2223 = vperm.xlu0 %2222, %v311
        %v2224 = vpop.permute.xlu0 %2223
        %2226 = vset.pattern.permute.xlu0 5
        %2227 = vperm.xlu0 %2226, %v312
        %v2228 = vpop.permute.xlu0 %2227
        %2230 = vset.pattern.permute.xlu0 5
        %2231 = vperm.xlu0 %2230, %v313
        %v2232 = vpop.permute.xlu0 %2231
        %v2234 = vmul.f32 %v1980, %v186
        %v2235 = vmul.f32 %v1984, %v187
        %v2236 = vmul.f32 %v1988, %v188
        %v2237 = vmul.f32 %v1992, %v189
        %v2238 = vmul.f32 %v1996, %v190
        %v2239 = vmul.f32 %v2000, %v191
        %v2240 = vmul.f32 %v2004, %v192
        %v2241 = vmul.f32 %v2008, %v193
        %v2242 = vmul.f32 %v2012, %v194
        %v2243 = vmul.f32 %v2016, %v195
        %v2244 = vmul.f32 %v2020, %v196
        %v2245 = vmul.f32 %v2024, %v197
        %v2246 = vmul.f32 %v2028, %v198
        %v2247 = vmul.f32 %v2032, %v199
        %v2248 = vmul.f32 %v2036, %v200
        %v2249 = vmul.f32 %v2040, %v201
        %v2250 = vmul.f32 %v2044, %v202
        %v2251 = vmul.f32 %v2048, %v203
        %v2252 = vmul.f32 %v2052, %v204
        %v2253 = vmul.f32 %v2056, %v205
        %v2254 = vmul.f32 %v2060, %v206
        %v2255 = vmul.f32 %v2064, %v207
        %v2256 = vmul.f32 %v2068, %v208
        %v2257 = vmul.f32 %v2072, %v209
        %v2258 = vmul.f32 %v2076, %v210
        %v2259 = vmul.f32 %v2080, %v211
        %v2260 = vmul.f32 %v2084, %v212
        %v2261 = vmul.f32 %v2088, %v213
        %v2262 = vmul.f32 %v2092, %v214
        %v2263 = vmul.f32 %v2096, %v215
        %v2264 = vmul.f32 %v2100, %v216
        %v2265 = vmul.f32 %v2104, %v217
        %v2266 = vmul.f32 %v2108, %v218
        %v2267 = vmul.f32 %v2112, %v219
        %v2268 = vmul.f32 %v2116, %v220
        %v2269 = vmul.f32 %v2120, %v221
        %v2270 = vmul.f32 %v2124, %v222
        %v2271 = vmul.f32 %v2128, %v223
        %v2272 = vmul.f32 %v2132, %v224
        %v2273 = vmul.f32 %v2136, %v225
        %v2274 = vmul.f32 %v2140, %v226
        %v2275 = vmul.f32 %v2144, %v227
        %v2276 = vmul.f32 %v2148, %v228
        %v2277 = vmul.f32 %v2152, %v229
        %v2278 = vmul.f32 %v2156, %v230
        %v2279 = vmul.f32 %v2160, %v231
        %v2280 = vmul.f32 %v2164, %v232
        %v2281 = vmul.f32 %v2168, %v233
        %v2282 = vmul.f32 %v2172, %v234
        %v2283 = vmul.f32 %v2176, %v235
        %v2284 = vmul.f32 %v2180, %v236
        %v2285 = vmul.f32 %v2184, %v237
        %v2286 = vmul.f32 %v2188, %v238
        %v2287 = vmul.f32 %v2192, %v239
        %v2288 = vmul.f32 %v2196, %v240
        %v2289 = vmul.f32 %v2200, %v241
        %v2290 = vmul.f32 %v2204, %v242
        %v2291 = vmul.f32 %v2208, %v243
        %v2292 = vmul.f32 %v2212, %v244
        %v2293 = vmul.f32 %v2216, %v245
        %v2294 = vmul.f32 %v2220, %v246
        %v2295 = vmul.f32 %v2224, %v247
        %v2296 = vmul.f32 %v2228, %v248
        %v2297 = vmul.f32 %v2232, %v249
        %2298 = vset.pattern.permute.xlu0 6
        %2299 = vperm.xlu0 %2298, %v250
        %v2300 = vpop.permute.xlu0 %2299
        %2302 = vset.pattern.permute.xlu0 6
        %2303 = vperm.xlu0 %2302, %v251
        %v2304 = vpop.permute.xlu0 %2303
        %2306 = vset.pattern.permute.xlu0 6
        %2307 = vperm.xlu0 %2306, %v252
        %v2308 = vpop.permute.xlu0 %2307
        %2310 = vset.pattern.permute.xlu0 6
        %2311 = vperm.xlu0 %2310, %v253
        %v2312 = vpop.permute.xlu0 %2311
        %2314 = vset.pattern.permute.xlu0 6
        %2315 = vperm.xlu0 %2314, %v254
        %v2316 = vpop.permute.xlu0 %2315
        %2318 = vset.pattern.permute.xlu0 6
        %2319 = vperm.xlu0 %2318, %v255
        %v2320 = vpop.permute.xlu0 %2319
        %2322 = vset.pattern.permute.xlu0 6
        %2323 = vperm.xlu0 %2322, %v256
        %v2324 = vpop.permute.xlu0 %2323
        %2326 = vset.pattern.permute.xlu0 6
        %2327 = vperm.xlu0 %2326, %v257
        %v2328 = vpop.permute.xlu0 %2327
        %2330 = vset.pattern.permute.xlu0 6
        %2331 = vperm.xlu0 %2330, %v258
        %v2332 = vpop.permute.xlu0 %2331
        %2334 = vset.pattern.permute.xlu0 6
        %2335 = vperm.xlu0 %2334, %v259
        %v2336 = vpop.permute.xlu0 %2335
        %2338 = vset.pattern.permute.xlu0 6
        %2339 = vperm.xlu0 %2338, %v260
        %v2340 = vpop.permute.xlu0 %2339
        %2342 = vset.pattern.permute.xlu0 6
        %2343 = vperm.xlu0 %2342, %v261
        %v2344 = vpop.permute.xlu0 %2343
        %2346 = vset.pattern.permute.xlu0 6
        %2347 = vperm.xlu0 %2346, %v262
        %v2348 = vpop.permute.xlu0 %2347
        %2350 = vset.pattern.permute.xlu0 6
        %2351 = vperm.xlu0 %2350, %v263
        %v2352 = vpop.permute.xlu0 %2351
        %2354 = vset.pattern.permute.xlu0 6
        %2355 = vperm.xlu0 %2354, %v264
        %v2356 = vpop.permute.xlu0 %2355
        %2358 = vset.pattern.permute.xlu0 6
        %2359 = vperm.xlu0 %2358, %v265
        %v2360 = vpop.permute.xlu0 %2359
        %2362 = vset.pattern.permute.xlu0 6
        %2363 = vperm.xlu0 %2362, %v266
        %v2364 = vpop.permute.xlu0 %2363
        %2366 = vset.pattern.permute.xlu0 6
        %2367 = vperm.xlu0 %2366, %v267
        %v2368 = vpop.permute.xlu0 %2367
        %2370 = vset.pattern.permute.xlu0 6
        %2371 = vperm.xlu0 %2370, %v268
        %v2372 = vpop.permute.xlu0 %2371
        %2374 = vset.pattern.permute.xlu0 6
        %2375 = vperm.xlu0 %2374, %v269
        %v2376 = vpop.permute.xlu0 %2375
        %2378 = vset.pattern.permute.xlu0 6
        %2379 = vperm.xlu0 %2378, %v270
        %v2380 = vpop.permute.xlu0 %2379
        %2382 = vset.pattern.permute.xlu0 6
        %2383 = vperm.xlu0 %2382, %v271
        %v2384 = vpop.permute.xlu0 %2383
        %2386 = vset.pattern.permute.xlu0 6
        %2387 = vperm.xlu0 %2386, %v272
        %v2388 = vpop.permute.xlu0 %2387
        %2390 = vset.pattern.permute.xlu0 6
        %2391 = vperm.xlu0 %2390, %v273
        %v2392 = vpop.permute.xlu0 %2391
        %2394 = vset.pattern.permute.xlu0 6
        %2395 = vperm.xlu0 %2394, %v274
        %v2396 = vpop.permute.xlu0 %2395
        %2398 = vset.pattern.permute.xlu0 6
        %2399 = vperm.xlu0 %2398, %v275
        %v2400 = vpop.permute.xlu0 %2399
        %2402 = vset.pattern.permute.xlu0 6
        %2403 = vperm.xlu0 %2402, %v276
        %v2404 = vpop.permute.xlu0 %2403
        %2406 = vset.pattern.permute.xlu0 6
        %2407 = vperm.xlu0 %2406, %v277
        %v2408 = vpop.permute.xlu0 %2407
        %2410 = vset.pattern.permute.xlu0 6
        %2411 = vperm.xlu0 %2410, %v278
        %v2412 = vpop.permute.xlu0 %2411
        %2414 = vset.pattern.permute.xlu0 6
        %2415 = vperm.xlu0 %2414, %v279
        %v2416 = vpop.permute.xlu0 %2415
        %2418 = vset.pattern.permute.xlu0 6
        %2419 = vperm.xlu0 %2418, %v280
        %v2420 = vpop.permute.xlu0 %2419
        %2422 = vset.pattern.permute.xlu0 6
        %2423 = vperm.xlu0 %2422, %v281
        %v2424 = vpop.permute.xlu0 %2423
        %2426 = vset.pattern.permute.xlu0 6
        %2427 = vperm.xlu0 %2426, %v282
        %v2428 = vpop.permute.xlu0 %2427
        %2430 = vset.pattern.permute.xlu0 6
        %2431 = vperm.xlu0 %2430, %v283
        %v2432 = vpop.permute.xlu0 %2431
        %2434 = vset.pattern.permute.xlu0 6
        %2435 = vperm.xlu0 %2434, %v284
        %v2436 = vpop.permute.xlu0 %2435
        %2438 = vset.pattern.permute.xlu0 6
        %2439 = vperm.xlu0 %2438, %v285
        %v2440 = vpop.permute.xlu0 %2439
        %2442 = vset.pattern.permute.xlu0 6
        %2443 = vperm.xlu0 %2442, %v286
        %v2444 = vpop.permute.xlu0 %2443
        %2446 = vset.pattern.permute.xlu0 6
        %2447 = vperm.xlu0 %2446, %v287
        %v2448 = vpop.permute.xlu0 %2447
        %2450 = vset.pattern.permute.xlu0 6
        %2451 = vperm.xlu0 %2450, %v288
        %v2452 = vpop.permute.xlu0 %2451
        %2454 = vset.pattern.permute.xlu0 6
        %2455 = vperm.xlu0 %2454, %v289
        %v2456 = vpop.permute.xlu0 %2455
        %2458 = vset.pattern.permute.xlu0 6
        %2459 = vperm.xlu0 %2458, %v290
        %v2460 = vpop.permute.xlu0 %2459
        %2462 = vset.pattern.permute.xlu0 6
        %2463 = vperm.xlu0 %2462, %v291
        %v2464 = vpop.permute.xlu0 %2463
        %2466 = vset.pattern.permute.xlu0 6
        %2467 = vperm.xlu0 %2466, %v292
        %v2468 = vpop.permute.xlu0 %2467
        %2470 = vset.pattern.permute.xlu0 6
        %2471 = vperm.xlu0 %2470, %v293
        %v2472 = vpop.permute.xlu0 %2471
        %2474 = vset.pattern.permute.xlu0 6
        %2475 = vperm.xlu0 %2474, %v294
        %v2476 = vpop.permute.xlu0 %2475
        %2478 = vset.pattern.permute.xlu0 6
        %2479 = vperm.xlu0 %2478, %v295
        %v2480 = vpop.permute.xlu0 %2479
        %2482 = vset.pattern.permute.xlu0 6
        %2483 = vperm.xlu0 %2482, %v296
        %v2484 = vpop.permute.xlu0 %2483
        %2486 = vset.pattern.permute.xlu0 6
        %2487 = vperm.xlu0 %2486, %v297
        %v2488 = vpop.permute.xlu0 %2487
        %2490 = vset.pattern.permute.xlu0 6
        %2491 = vperm.xlu0 %2490, %v298
        %v2492 = vpop.permute.xlu0 %2491
        %2494 = vset.pattern.permute.xlu0 6
        %2495 = vperm.xlu0 %2494, %v299
        %v2496 = vpop.permute.xlu0 %2495
        %2498 = vset.pattern.permute.xlu0 6
        %2499 = vperm.xlu0 %2498, %v300
        %v2500 = vpop.permute.xlu0 %2499
        %2502 = vset.pattern.permute.xlu0 6
        %2503 = vperm.xlu0 %2502, %v301
        %v2504 = vpop.permute.xlu0 %2503
        %2506 = vset.pattern.permute.xlu0 6
        %2507 = vperm.xlu0 %2506, %v302
        %v2508 = vpop.permute.xlu0 %2507
        %2510 = vset.pattern.permute.xlu0 6
        %2511 = vperm.xlu0 %2510, %v303
        %v2512 = vpop.permute.xlu0 %2511
        %2514 = vset.pattern.permute.xlu0 6
        %2515 = vperm.xlu0 %2514, %v304
        %v2516 = vpop.permute.xlu0 %2515
        %2518 = vset.pattern.permute.xlu0 6
        %2519 = vperm.xlu0 %2518, %v305
        %v2520 = vpop.permute.xlu0 %2519
        %2522 = vset.pattern.permute.xlu0 6
        %2523 = vperm.xlu0 %2522, %v306
        %v2524 = vpop.permute.xlu0 %2523
        %2526 = vset.pattern.permute.xlu0 6
        %2527 = vperm.xlu0 %2526, %v307
        %v2528 = vpop.permute.xlu0 %2527
        %2530 = vset.pattern.permute.xlu0 6
        %2531 = vperm.xlu0 %2530, %v308
        %v2532 = vpop.permute.xlu0 %2531
        %2534 = vset.pattern.permute.xlu0 6
        %2535 = vperm.xlu0 %2534, %v309
        %v2536 = vpop.permute.xlu0 %2535
        %2538 = vset.pattern.permute.xlu0 6
        %2539 = vperm.xlu0 %2538, %v310
        %v2540 = vpop.permute.xlu0 %2539
        %2542 = vset.pattern.permute.xlu0 6
        %2543 = vperm.xlu0 %2542, %v311
        %v2544 = vpop.permute.xlu0 %2543
        %2546 = vset.pattern.permute.xlu0 6
        %2547 = vperm.xlu0 %2546, %v312
        %v2548 = vpop.permute.xlu0 %2547
        %2550 = vset.pattern.permute.xlu0 6
        %2551 = vperm.xlu0 %2550, %v313
        %v2552 = vpop.permute.xlu0 %2551
        %v2554 = vmul.f32 %v2300, %v186
        %v2555 = vmul.f32 %v2304, %v187
        %v2556 = vmul.f32 %v2308, %v188
        %v2557 = vmul.f32 %v2312, %v189
        %v2558 = vmul.f32 %v2316, %v190
        %v2559 = vmul.f32 %v2320, %v191
        %v2560 = vmul.f32 %v2324, %v192
        %v2561 = vmul.f32 %v2328, %v193
        %v2562 = vmul.f32 %v2332, %v194
        %v2563 = vmul.f32 %v2336, %v195
        %v2564 = vmul.f32 %v2340, %v196
        %v2565 = vmul.f32 %v2344, %v197
        %v2566 = vmul.f32 %v2348, %v198
        %v2567 = vmul.f32 %v2352, %v199
        %v2568 = vmul.f32 %v2356, %v200
        %v2569 = vmul.f32 %v2360, %v201
        %v2570 = vmul.f32 %v2364, %v202
        %v2571 = vmul.f32 %v2368, %v203
        %v2572 = vmul.f32 %v2372, %v204
        %v2573 = vmul.f32 %v2376, %v205
        %v2574 = vmul.f32 %v2380, %v206
        %v2575 = vmul.f32 %v2384, %v207
        %v2576 = vmul.f32 %v2388, %v208
        %v2577 = vmul.f32 %v2392, %v209
        %v2578 = vmul.f32 %v2396, %v210
        %v2579 = vmul.f32 %v2400, %v211
        %v2580 = vmul.f32 %v2404, %v212
        %v2581 = vmul.f32 %v2408, %v213
        %v2582 = vmul.f32 %v2412, %v214
        %v2583 = vmul.f32 %v2416, %v215
        %v2584 = vmul.f32 %v2420, %v216
        %v2585 = vmul.f32 %v2424, %v217
        %v2586 = vmul.f32 %v2428, %v218
        %v2587 = vmul.f32 %v2432, %v219
        %v2588 = vmul.f32 %v2436, %v220
        %v2589 = vmul.f32 %v2440, %v221
        %v2590 = vmul.f32 %v2444, %v222
        %v2591 = vmul.f32 %v2448, %v223
        %v2592 = vmul.f32 %v2452, %v224
        %v2593 = vmul.f32 %v2456, %v225
        %v2594 = vmul.f32 %v2460, %v226
        %v2595 = vmul.f32 %v2464, %v227
        %v2596 = vmul.f32 %v2468, %v228
        %v2597 = vmul.f32 %v2472, %v229
        %v2598 = vmul.f32 %v2476, %v230
        %v2599 = vmul.f32 %v2480, %v231
        %v2600 = vmul.f32 %v2484, %v232
        %v2601 = vmul.f32 %v2488, %v233
        %v2602 = vmul.f32 %v2492, %v234
        %v2603 = vmul.f32 %v2496, %v235
        %v2604 = vmul.f32 %v2500, %v236
        %v2605 = vmul.f32 %v2504, %v237
        %v2606 = vmul.f32 %v2508, %v238
        %v2607 = vmul.f32 %v2512, %v239
        %v2608 = vmul.f32 %v2516, %v240
        %v2609 = vmul.f32 %v2520, %v241
        %v2610 = vmul.f32 %v2524, %v242
        %v2611 = vmul.f32 %v2528, %v243
        %v2612 = vmul.f32 %v2532, %v244
        %v2613 = vmul.f32 %v2536, %v245
        %v2614 = vmul.f32 %v2540, %v246
        %v2615 = vmul.f32 %v2544, %v247
        %v2616 = vmul.f32 %v2548, %v248
        %v2617 = vmul.f32 %v2552, %v249
        %2618 = vset.pattern.permute.xlu0 7
        %2619 = vperm.xlu0 %2618, %v250
        %v2620 = vpop.permute.xlu0 %2619
        %2622 = vset.pattern.permute.xlu0 7
        %2623 = vperm.xlu0 %2622, %v251
        %v2624 = vpop.permute.xlu0 %2623
        %2626 = vset.pattern.permute.xlu0 7
        %2627 = vperm.xlu0 %2626, %v252
        %v2628 = vpop.permute.xlu0 %2627
        %2630 = vset.pattern.permute.xlu0 7
        %2631 = vperm.xlu0 %2630, %v253
        %v2632 = vpop.permute.xlu0 %2631
        %2634 = vset.pattern.permute.xlu0 7
        %2635 = vperm.xlu0 %2634, %v254
        %v2636 = vpop.permute.xlu0 %2635
        %2638 = vset.pattern.permute.xlu0 7
        %2639 = vperm.xlu0 %2638, %v255
        %v2640 = vpop.permute.xlu0 %2639
        %2642 = vset.pattern.permute.xlu0 7
        %2643 = vperm.xlu0 %2642, %v256
        %v2644 = vpop.permute.xlu0 %2643
        %2646 = vset.pattern.permute.xlu0 7
        %2647 = vperm.xlu0 %2646, %v257
        %v2648 = vpop.permute.xlu0 %2647
        %2650 = vset.pattern.permute.xlu0 7
        %2651 = vperm.xlu0 %2650, %v258
        %v2652 = vpop.permute.xlu0 %2651
        %2654 = vset.pattern.permute.xlu0 7
        %2655 = vperm.xlu0 %2654, %v259
        %v2656 = vpop.permute.xlu0 %2655
        %2658 = vset.pattern.permute.xlu0 7
        %2659 = vperm.xlu0 %2658, %v260
        %v2660 = vpop.permute.xlu0 %2659
        %2662 = vset.pattern.permute.xlu0 7
        %2663 = vperm.xlu0 %2662, %v261
        %v2664 = vpop.permute.xlu0 %2663
        %2666 = vset.pattern.permute.xlu0 7
        %2667 = vperm.xlu0 %2666, %v262
        %v2668 = vpop.permute.xlu0 %2667
        %2670 = vset.pattern.permute.xlu0 7
        %2671 = vperm.xlu0 %2670, %v263
        %v2672 = vpop.permute.xlu0 %2671
        %2674 = vset.pattern.permute.xlu0 7
        %2675 = vperm.xlu0 %2674, %v264
        %v2676 = vpop.permute.xlu0 %2675
        %2678 = vset.pattern.permute.xlu0 7
        %2679 = vperm.xlu0 %2678, %v265
        %v2680 = vpop.permute.xlu0 %2679
        %2682 = vset.pattern.permute.xlu0 7
        %2683 = vperm.xlu0 %2682, %v266
        %v2684 = vpop.permute.xlu0 %2683
        %2686 = vset.pattern.permute.xlu0 7
        %2687 = vperm.xlu0 %2686, %v267
        %v2688 = vpop.permute.xlu0 %2687
        %2690 = vset.pattern.permute.xlu0 7
        %2691 = vperm.xlu0 %2690, %v268
        %v2692 = vpop.permute.xlu0 %2691
        %2694 = vset.pattern.permute.xlu0 7
        %2695 = vperm.xlu0 %2694, %v269
        %v2696 = vpop.permute.xlu0 %2695
        %2698 = vset.pattern.permute.xlu0 7
        %2699 = vperm.xlu0 %2698, %v270
        %v2700 = vpop.permute.xlu0 %2699
        %2702 = vset.pattern.permute.xlu0 7
        %2703 = vperm.xlu0 %2702, %v271
        %v2704 = vpop.permute.xlu0 %2703
        %2706 = vset.pattern.permute.xlu0 7
        %2707 = vperm.xlu0 %2706, %v272
        %v2708 = vpop.permute.xlu0 %2707
        %2710 = vset.pattern.permute.xlu0 7
        %2711 = vperm.xlu0 %2710, %v273
        %v2712 = vpop.permute.xlu0 %2711
        %2714 = vset.pattern.permute.xlu0 7
        %2715 = vperm.xlu0 %2714, %v274
        %v2716 = vpop.permute.xlu0 %2715
        %2718 = vset.pattern.permute.xlu0 7
        %2719 = vperm.xlu0 %2718, %v275
        %v2720 = vpop.permute.xlu0 %2719
        %2722 = vset.pattern.permute.xlu0 7
        %2723 = vperm.xlu0 %2722, %v276
        %v2724 = vpop.permute.xlu0 %2723
        %2726 = vset.pattern.permute.xlu0 7
        %2727 = vperm.xlu0 %2726, %v277
        %v2728 = vpop.permute.xlu0 %2727
        %2730 = vset.pattern.permute.xlu0 7
        %2731 = vperm.xlu0 %2730, %v278
        %v2732 = vpop.permute.xlu0 %2731
        %2734 = vset.pattern.permute.xlu0 7
        %2735 = vperm.xlu0 %2734, %v279
        %v2736 = vpop.permute.xlu0 %2735
        %2738 = vset.pattern.permute.xlu0 7
        %2739 = vperm.xlu0 %2738, %v280
        %v2740 = vpop.permute.xlu0 %2739
        %2742 = vset.pattern.permute.xlu0 7
        %2743 = vperm.xlu0 %2742, %v281
        %v2744 = vpop.permute.xlu0 %2743
        %2746 = vset.pattern.permute.xlu0 7
        %2747 = vperm.xlu0 %2746, %v282
        %v2748 = vpop.permute.xlu0 %2747
        %2750 = vset.pattern.permute.xlu0 7
        %2751 = vperm.xlu0 %2750, %v283
        %v2752 = vpop.permute.xlu0 %2751
        %2754 = vset.pattern.permute.xlu0 7
        %2755 = vperm.xlu0 %2754, %v284
        %v2756 = vpop.permute.xlu0 %2755
        %2758 = vset.pattern.permute.xlu0 7
        %2759 = vperm.xlu0 %2758, %v285
        %v2760 = vpop.permute.xlu0 %2759
        %2762 = vset.pattern.permute.xlu0 7
        %2763 = vperm.xlu0 %2762, %v286
        %v2764 = vpop.permute.xlu0 %2763
        %2766 = vset.pattern.permute.xlu0 7
        %2767 = vperm.xlu0 %2766, %v287
        %v2768 = vpop.permute.xlu0 %2767
        %2770 = vset.pattern.permute.xlu0 7
        %2771 = vperm.xlu0 %2770, %v288
        %v2772 = vpop.permute.xlu0 %2771
        %2774 = vset.pattern.permute.xlu0 7
        %2775 = vperm.xlu0 %2774, %v289
        %v2776 = vpop.permute.xlu0 %2775
        %2778 = vset.pattern.permute.xlu0 7
        %2779 = vperm.xlu0 %2778, %v290
        %v2780 = vpop.permute.xlu0 %2779
        %2782 = vset.pattern.permute.xlu0 7
        %2783 = vperm.xlu0 %2782, %v291
        %v2784 = vpop.permute.xlu0 %2783
        %2786 = vset.pattern.permute.xlu0 7
        %2787 = vperm.xlu0 %2786, %v292
        %v2788 = vpop.permute.xlu0 %2787
        %2790 = vset.pattern.permute.xlu0 7
        %2791 = vperm.xlu0 %2790, %v293
        %v2792 = vpop.permute.xlu0 %2791
        %2794 = vset.pattern.permute.xlu0 7
        %2795 = vperm.xlu0 %2794, %v294
        %v2796 = vpop.permute.xlu0 %2795
        %2798 = vset.pattern.permute.xlu0 7
        %2799 = vperm.xlu0 %2798, %v295
        %v2800 = vpop.permute.xlu0 %2799
        %2802 = vset.pattern.permute.xlu0 7
        %2803 = vperm.xlu0 %2802, %v296
        %v2804 = vpop.permute.xlu0 %2803
        %2806 = vset.pattern.permute.xlu0 7
        %2807 = vperm.xlu0 %2806, %v297
        %v2808 = vpop.permute.xlu0 %2807
        %2810 = vset.pattern.permute.xlu0 7
        %2811 = vperm.xlu0 %2810, %v298
        %v2812 = vpop.permute.xlu0 %2811
        %2814 = vset.pattern.permute.xlu0 7
        %2815 = vperm.xlu0 %2814, %v299
        %v2816 = vpop.permute.xlu0 %2815
        %2818 = vset.pattern.permute.xlu0 7
        %2819 = vperm.xlu0 %2818, %v300
        %v2820 = vpop.permute.xlu0 %2819
        %2822 = vset.pattern.permute.xlu0 7
        %2823 = vperm.xlu0 %2822, %v301
        %v2824 = vpop.permute.xlu0 %2823
        %2826 = vset.pattern.permute.xlu0 7
        %2827 = vperm.xlu0 %2826, %v302
        %v2828 = vpop.permute.xlu0 %2827
        %2830 = vset.pattern.permute.xlu0 7
        %2831 = vperm.xlu0 %2830, %v303
        %v2832 = vpop.permute.xlu0 %2831
        %2834 = vset.pattern.permute.xlu0 7
        %2835 = vperm.xlu0 %2834, %v304
        %v2836 = vpop.permute.xlu0 %2835
        %2838 = vset.pattern.permute.xlu0 7
        %2839 = vperm.xlu0 %2838, %v305
        %v2840 = vpop.permute.xlu0 %2839
        %2842 = vset.pattern.permute.xlu0 7
        %2843 = vperm.xlu0 %2842, %v306
        %v2844 = vpop.permute.xlu0 %2843
        %2846 = vset.pattern.permute.xlu0 7
        %2847 = vperm.xlu0 %2846, %v307
        %v2848 = vpop.permute.xlu0 %2847
        %2850 = vset.pattern.permute.xlu0 7
        %2851 = vperm.xlu0 %2850, %v308
        %v2852 = vpop.permute.xlu0 %2851
        %2854 = vset.pattern.permute.xlu0 7
        %2855 = vperm.xlu0 %2854, %v309
        %v2856 = vpop.permute.xlu0 %2855
        %2858 = vset.pattern.permute.xlu0 7
        %2859 = vperm.xlu0 %2858, %v310
        %v2860 = vpop.permute.xlu0 %2859
        %2862 = vset.pattern.permute.xlu0 7
        %2863 = vperm.xlu0 %2862, %v311
        %v2864 = vpop.permute.xlu0 %2863
        %2866 = vset.pattern.permute.xlu0 7
        %2867 = vperm.xlu0 %2866, %v312
        %v2868 = vpop.permute.xlu0 %2867
        %2870 = vset.pattern.permute.xlu0 7
        %2871 = vperm.xlu0 %2870, %v313
        %v2872 = vpop.permute.xlu0 %2871
        %v2874 = vmul.f32 %v2620, %v186
        %v2875 = vmul.f32 %v2624, %v187
        %v2876 = vmul.f32 %v2628, %v188
        %v2877 = vmul.f32 %v2632, %v189
        %v2878 = vmul.f32 %v2636, %v190
        %v2879 = vmul.f32 %v2640, %v191
        %v2880 = vmul.f32 %v2644, %v192
        %v2881 = vmul.f32 %v2648, %v193
        %v2882 = vmul.f32 %v2652, %v194
        %v2883 = vmul.f32 %v2656, %v195
        %v2884 = vmul.f32 %v2660, %v196
        %v2885 = vmul.f32 %v2664, %v197
        %v2886 = vmul.f32 %v2668, %v198
        %v2887 = vmul.f32 %v2672, %v199
        %v2888 = vmul.f32 %v2676, %v200
        %v2889 = vmul.f32 %v2680, %v201
        %v2890 = vmul.f32 %v2684, %v202
        %v2891 = vmul.f32 %v2688, %v203
        %v2892 = vmul.f32 %v2692, %v204
        %v2893 = vmul.f32 %v2696, %v205
        %v2894 = vmul.f32 %v2700, %v206
        %v2895 = vmul.f32 %v2704, %v207
        %v2896 = vmul.f32 %v2708, %v208
        %v2897 = vmul.f32 %v2712, %v209
        %v2898 = vmul.f32 %v2716, %v210
        %v2899 = vmul.f32 %v2720, %v211
        %v2900 = vmul.f32 %v2724, %v212
        %v2901 = vmul.f32 %v2728, %v213
        %v2902 = vmul.f32 %v2732, %v214
        %v2903 = vmul.f32 %v2736, %v215
        %v2904 = vmul.f32 %v2740, %v216
        %v2905 = vmul.f32 %v2744, %v217
        %v2906 = vmul.f32 %v2748, %v218
        %v2907 = vmul.f32 %v2752, %v219
        %v2908 = vmul.f32 %v2756, %v220
        %v2909 = vmul.f32 %v2760, %v221
        %v2910 = vmul.f32 %v2764, %v222
        %v2911 = vmul.f32 %v2768, %v223
        %v2912 = vmul.f32 %v2772, %v224
        %v2913 = vmul.f32 %v2776, %v225
        %v2914 = vmul.f32 %v2780, %v226
        %v2915 = vmul.f32 %v2784, %v227
        %v2916 = vmul.f32 %v2788, %v228
        %v2917 = vmul.f32 %v2792, %v229
        %v2918 = vmul.f32 %v2796, %v230
        %v2919 = vmul.f32 %v2800, %v231
        %v2920 = vmul.f32 %v2804, %v232
        %v2921 = vmul.f32 %v2808, %v233
        %v2922 = vmul.f32 %v2812, %v234
        %v2923 = vmul.f32 %v2816, %v235
        %v2924 = vmul.f32 %v2820, %v236
        %v2925 = vmul.f32 %v2824, %v237
        %v2926 = vmul.f32 %v2828, %v238
        %v2927 = vmul.f32 %v2832, %v239
        %v2928 = vmul.f32 %v2836, %v240
        %v2929 = vmul.f32 %v2840, %v241
        %v2930 = vmul.f32 %v2844, %v242
        %v2931 = vmul.f32 %v2848, %v243
        %v2932 = vmul.f32 %v2852, %v244
        %v2933 = vmul.f32 %v2856, %v245
        %v2934 = vmul.f32 %v2860, %v246
        %v2935 = vmul.f32 %v2864, %v247
        %v2936 = vmul.f32 %v2868, %v248
        %v2937 = vmul.f32 %v2872, %v249
        %2938 = vst [vmem:[%s177] sm:$0xff] %v634
        %2939 = vst [vmem:[%s177 + $0x8] sm:$0xff] %v954
        %2940 = vst [vmem:[%s177 + $0x10] sm:$0xff] %v1274
        %2941 = vst [vmem:[%s177 + $0x18] sm:$0xff] %v1594
        %2942 = vst [vmem:[%s177 + $0x20] sm:$0xff] %v1914
        %2943 = vst [vmem:[%s177 + $0x28] sm:$0xff] %v2234
        %2944 = vst [vmem:[%s177 + $0x30] sm:$0xff] %v2554
        %2945 = vst [vmem:[%s177 + $0x38] sm:$0xff] %v2874
        %2946 = vst [vmem:[%s177 + $0x40] sm:$0xff] %v635
        %2947 = vst [vmem:[%s177 + $0x48] sm:$0xff] %v955
        %2948 = vst [vmem:[%s177 + $0x50] sm:$0xff] %v1275
        %2949 = vst [vmem:[%s177 + $0x58] sm:$0xff] %v1595
        %2950 = vst [vmem:[%s177 + $0x60] sm:$0xff] %v1915
        %2951 = vst [vmem:[%s177 + $0x68] sm:$0xff] %v2235
        %2952 = vst [vmem:[%s177 + $0x70] sm:$0xff] %v2555
        %2953 = vst [vmem:[%s177 + $0x78] sm:$0xff] %v2875
        %2954 = vst [vmem:[%s177 + $0x80] sm:$0xff] %v636
        %2955 = vst [vmem:[%s177 + $0x88] sm:$0xff] %v956
        %2956 = vst [vmem:[%s177 + $0x90] sm:$0xff] %v1276
        %2957 = vst [vmem:[%s177 + $0x98] sm:$0xff] %v1596
        %2958 = vst [vmem:[%s177 + $0xa0] sm:$0xff] %v1916
        %2959 = vst [vmem:[%s177 + $0xa8] sm:$0xff] %v2236
        %2960 = vst [vmem:[%s177 + $0xb0] sm:$0xff] %v2556
        %2961 = vst [vmem:[%s177 + $0xb8] sm:$0xff] %v2876
        %2962 = vst [vmem:[%s177 + $0xc0] sm:$0xff] %v637
        %2963 = vst [vmem:[%s177 + $0xc8] sm:$0xff] %v957
        %2964 = vst [vmem:[%s177 + $0xd0] sm:$0xff] %v1277
        %2965 = vst [vmem:[%s177 + $0xd8] sm:$0xff] %v1597
        %2966 = vst [vmem:[%s177 + $0xe0] sm:$0xff] %v1917
        %2967 = vst [vmem:[%s177 + $0xe8] sm:$0xff] %v2237
        %2968 = vst [vmem:[%s177 + $0xf0] sm:$0xff] %v2557
        %2969 = vst [vmem:[%s177 + $0xf8] sm:$0xff] %v2877
        %2970 = vst [vmem:[%s177 + $0x100] sm:$0xff] %v638
        %2971 = vst [vmem:[%s177 + $0x108] sm:$0xff] %v958
        %2972 = vst [vmem:[%s177 + $0x110] sm:$0xff] %v1278
        %2973 = vst [vmem:[%s177 + $0x118] sm:$0xff] %v1598
        %2974 = vst [vmem:[%s177 + $0x120] sm:$0xff] %v1918
        %2975 = vst [vmem:[%s177 + $0x128] sm:$0xff] %v2238
        %2976 = vst [vmem:[%s177 + $0x130] sm:$0xff] %v2558
        %2977 = vst [vmem:[%s177 + $0x138] sm:$0xff] %v2878
        %2978 = vst [vmem:[%s177 + $0x140] sm:$0xff] %v639
        %2979 = vst [vmem:[%s177 + $0x148] sm:$0xff] %v959
        %2980 = vst [vmem:[%s177 + $0x150] sm:$0xff] %v1279
        %2981 = vst [vmem:[%s177 + $0x158] sm:$0xff] %v1599
        %2982 = vst [vmem:[%s177 + $0x160] sm:$0xff] %v1919
        %2983 = vst [vmem:[%s177 + $0x168] sm:$0xff] %v2239
        %2984 = vst [vmem:[%s177 + $0x170] sm:$0xff] %v2559
        %2985 = vst [vmem:[%s177 + $0x178] sm:$0xff] %v2879
        %2986 = vst [vmem:[%s177 + $0x180] sm:$0xff] %v640
        %2987 = vst [vmem:[%s177 + $0x188] sm:$0xff] %v960
        %2988 = vst [vmem:[%s177 + $0x190] sm:$0xff] %v1280
        %2989 = vst [vmem:[%s177 + $0x198] sm:$0xff] %v1600
        %2990 = vst [vmem:[%s177 + $0x1a0] sm:$0xff] %v1920
        %2991 = vst [vmem:[%s177 + $0x1a8] sm:$0xff] %v2240
        %2992 = vst [vmem:[%s177 + $0x1b0] sm:$0xff] %v2560
        %2993 = vst [vmem:[%s177 + $0x1b8] sm:$0xff] %v2880
        %2994 = vst [vmem:[%s177 + $0x1c0] sm:$0xff] %v641
        %2995 = vst [vmem:[%s177 + $0x1c8] sm:$0xff] %v961
        %2996 = vst [vmem:[%s177 + $0x1d0] sm:$0xff] %v1281
        %2997 = vst [vmem:[%s177 + $0x1d8] sm:$0xff] %v1601
        %2998 = vst [vmem:[%s177 + $0x1e0] sm:$0xff] %v1921
        %2999 = vst [vmem:[%s177 + $0x1e8] sm:$0xff] %v2241
        %3000 = vst [vmem:[%s177 + $0x1f0] sm:$0xff] %v2561
        %3001 = vst [vmem:[%s177 + $0x1f8] sm:$0xff] %v2881
        %3002 = vst [vmem:[%s177 + $0x200] sm:$0xff] %v642
        %3003 = vst [vmem:[%s177 + $0x208] sm:$0xff] %v962
        %3004 = vst [vmem:[%s177 + $0x210] sm:$0xff] %v1282
        %3005 = vst [vmem:[%s177 + $0x218] sm:$0xff] %v1602
        %3006 = vst [vmem:[%s177 + $0x220] sm:$0xff] %v1922
        %3007 = vst [vmem:[%s177 + $0x228] sm:$0xff] %v2242
        %3008 = vst [vmem:[%s177 + $0x230] sm:$0xff] %v2562
        %3009 = vst [vmem:[%s177 + $0x238] sm:$0xff] %v2882
        %3010 = vst [vmem:[%s177 + $0x240] sm:$0xff] %v643
        %3011 = vst [vmem:[%s177 + $0x248] sm:$0xff] %v963
        %3012 = vst [vmem:[%s177 + $0x250] sm:$0xff] %v1283
        %3013 = vst [vmem:[%s177 + $0x258] sm:$0xff] %v1603
        %3014 = vst [vmem:[%s177 + $0x260] sm:$0xff] %v1923
        %3015 = vst [vmem:[%s177 + $0x268] sm:$0xff] %v2243
        %3016 = vst [vmem:[%s177 + $0x270] sm:$0xff] %v2563
        %3017 = vst [vmem:[%s177 + $0x278] sm:$0xff] %v2883
        %3018 = vst [vmem:[%s177 + $0x280] sm:$0xff] %v644
        %3019 = vst [vmem:[%s177 + $0x288] sm:$0xff] %v964
        %3020 = vst [vmem:[%s177 + $0x290] sm:$0xff] %v1284
        %3021 = vst [vmem:[%s177 + $0x298] sm:$0xff] %v1604
        %3022 = vst [vmem:[%s177 + $0x2a0] sm:$0xff] %v1924
        %3023 = vst [vmem:[%s177 + $0x2a8] sm:$0xff] %v2244
        %3024 = vst [vmem:[%s177 + $0x2b0] sm:$0xff] %v2564
        %3025 = vst [vmem:[%s177 + $0x2b8] sm:$0xff] %v2884
        %3026 = vst [vmem:[%s177 + $0x2c0] sm:$0xff] %v645
        %3027 = vst [vmem:[%s177 + $0x2c8] sm:$0xff] %v965
        %3028 = vst [vmem:[%s177 + $0x2d0] sm:$0xff] %v1285
        %3029 = vst [vmem:[%s177 + $0x2d8] sm:$0xff] %v1605
        %3030 = vst [vmem:[%s177 + $0x2e0] sm:$0xff] %v1925
        %3031 = vst [vmem:[%s177 + $0x2e8] sm:$0xff] %v2245
        %3032 = vst [vmem:[%s177 + $0x2f0] sm:$0xff] %v2565
        %3033 = vst [vmem:[%s177 + $0x2f8] sm:$0xff] %v2885
        %3034 = vst [vmem:[%s177 + $0x300] sm:$0xff] %v646
        %3035 = vst [vmem:[%s177 + $0x308] sm:$0xff] %v966
        %3036 = vst [vmem:[%s177 + $0x310] sm:$0xff] %v1286
        %3037 = vst [vmem:[%s177 + $0x318] sm:$0xff] %v1606
        %3038 = vst [vmem:[%s177 + $0x320] sm:$0xff] %v1926
        %3039 = vst [vmem:[%s177 + $0x328] sm:$0xff] %v2246
        %3040 = vst [vmem:[%s177 + $0x330] sm:$0xff] %v2566
        %3041 = vst [vmem:[%s177 + $0x338] sm:$0xff] %v2886
        %3042 = vst [vmem:[%s177 + $0x340] sm:$0xff] %v647
        %3043 = vst [vmem:[%s177 + $0x348] sm:$0xff] %v967
        %3044 = vst [vmem:[%s177 + $0x350] sm:$0xff] %v1287
        %3045 = vst [vmem:[%s177 + $0x358] sm:$0xff] %v1607
        %3046 = vst [vmem:[%s177 + $0x360] sm:$0xff] %v1927
        %3047 = vst [vmem:[%s177 + $0x368] sm:$0xff] %v2247
        %3048 = vst [vmem:[%s177 + $0x370] sm:$0xff] %v2567
        %3049 = vst [vmem:[%s177 + $0x378] sm:$0xff] %v2887
        %3050 = vst [vmem:[%s177 + $0x380] sm:$0xff] %v648
        %3051 = vst [vmem:[%s177 + $0x388] sm:$0xff] %v968
        %3052 = vst [vmem:[%s177 + $0x390] sm:$0xff] %v1288
        %3053 = vst [vmem:[%s177 + $0x398] sm:$0xff] %v1608
        %3054 = vst [vmem:[%s177 + $0x3a0] sm:$0xff] %v1928
        %3055 = vst [vmem:[%s177 + $0x3a8] sm:$0xff] %v2248
        %3056 = vst [vmem:[%s177 + $0x3b0] sm:$0xff] %v2568
        %3057 = vst [vmem:[%s177 + $0x3b8] sm:$0xff] %v2888
        %3058 = vst [vmem:[%s177 + $0x3c0] sm:$0xff] %v649
        %3059 = vst [vmem:[%s177 + $0x3c8] sm:$0xff] %v969
        %3060 = vst [vmem:[%s177 + $0x3d0] sm:$0xff] %v1289
        %3061 = vst [vmem:[%s177 + $0x3d8] sm:$0xff] %v1609
        %3062 = vst [vmem:[%s177 + $0x3e0] sm:$0xff] %v1929
        %3063 = vst [vmem:[%s177 + $0x3e8] sm:$0xff] %v2249
        %3064 = vst [vmem:[%s177 + $0x3f0] sm:$0xff] %v2569
        %3065 = vst [vmem:[%s177 + $0x3f8] sm:$0xff] %v2889
        %3066 = vst [vmem:[%s177 + $0x400] sm:$0xff] %v650
        %3067 = vst [vmem:[%s177 + $0x408] sm:$0xff] %v970
        %3068 = vst [vmem:[%s177 + $0x410] sm:$0xff] %v1290
        %3069 = vst [vmem:[%s177 + $0x418] sm:$0xff] %v1610
        %3070 = vst [vmem:[%s177 + $0x420] sm:$0xff] %v1930
        %3071 = vst [vmem:[%s177 + $0x428] sm:$0xff] %v2250
        %3072 = vst [vmem:[%s177 + $0x430] sm:$0xff] %v2570
        %3073 = vst [vmem:[%s177 + $0x438] sm:$0xff] %v2890
        %3074 = vst [vmem:[%s177 + $0x440] sm:$0xff] %v651
        %3075 = vst [vmem:[%s177 + $0x448] sm:$0xff] %v971
        %3076 = vst [vmem:[%s177 + $0x450] sm:$0xff] %v1291
        %3077 = vst [vmem:[%s177 + $0x458] sm:$0xff] %v1611
        %3078 = vst [vmem:[%s177 + $0x460] sm:$0xff] %v1931
        %3079 = vst [vmem:[%s177 + $0x468] sm:$0xff] %v2251
        %3080 = vst [vmem:[%s177 + $0x470] sm:$0xff] %v2571
        %3081 = vst [vmem:[%s177 + $0x478] sm:$0xff] %v2891
        %3082 = vst [vmem:[%s177 + $0x480] sm:$0xff] %v652
        %3083 = vst [vmem:[%s177 + $0x488] sm:$0xff] %v972
        %3084 = vst [vmem:[%s177 + $0x490] sm:$0xff] %v1292
        %3085 = vst [vmem:[%s177 + $0x498] sm:$0xff] %v1612
        %3086 = vst [vmem:[%s177 + $0x4a0] sm:$0xff] %v1932
        %3087 = vst [vmem:[%s177 + $0x4a8] sm:$0xff] %v2252
        %3088 = vst [vmem:[%s177 + $0x4b0] sm:$0xff] %v2572
        %3089 = vst [vmem:[%s177 + $0x4b8] sm:$0xff] %v2892
        %3090 = vst [vmem:[%s177 + $0x4c0] sm:$0xff] %v653
        %3091 = vst [vmem:[%s177 + $0x4c8] sm:$0xff] %v973
        %3092 = vst [vmem:[%s177 + $0x4d0] sm:$0xff] %v1293
        %3093 = vst [vmem:[%s177 + $0x4d8] sm:$0xff] %v1613
        %3094 = vst [vmem:[%s177 + $0x4e0] sm:$0xff] %v1933
        %3095 = vst [vmem:[%s177 + $0x4e8] sm:$0xff] %v2253
        %3096 = vst [vmem:[%s177 + $0x4f0] sm:$0xff] %v2573
        %3097 = vst [vmem:[%s177 + $0x4f8] sm:$0xff] %v2893
        %3098 = vst [vmem:[%s177 + $0x500] sm:$0xff] %v654
        %3099 = vst [vmem:[%s177 + $0x508] sm:$0xff] %v974
        %3100 = vst [vmem:[%s177 + $0x510] sm:$0xff] %v1294
        %3101 = vst [vmem:[%s177 + $0x518] sm:$0xff] %v1614
        %3102 = vst [vmem:[%s177 + $0x520] sm:$0xff] %v1934
        %3103 = vst [vmem:[%s177 + $0x528] sm:$0xff] %v2254
        %3104 = vst [vmem:[%s177 + $0x530] sm:$0xff] %v2574
        %3105 = vst [vmem:[%s177 + $0x538] sm:$0xff] %v2894
        %3106 = vst [vmem:[%s177 + $0x540] sm:$0xff] %v655
        %3107 = vst [vmem:[%s177 + $0x548] sm:$0xff] %v975
        %3108 = vst [vmem:[%s177 + $0x550] sm:$0xff] %v1295
        %3109 = vst [vmem:[%s177 + $0x558] sm:$0xff] %v1615
        %3110 = vst [vmem:[%s177 + $0x560] sm:$0xff] %v1935
        %3111 = vst [vmem:[%s177 + $0x568] sm:$0xff] %v2255
        %3112 = vst [vmem:[%s177 + $0x570] sm:$0xff] %v2575
        %3113 = vst [vmem:[%s177 + $0x578] sm:$0xff] %v2895
        %3114 = vst [vmem:[%s177 + $0x580] sm:$0xff] %v656
        %3115 = vst [vmem:[%s177 + $0x588] sm:$0xff] %v976
        %3116 = vst [vmem:[%s177 + $0x590] sm:$0xff] %v1296
        %3117 = vst [vmem:[%s177 + $0x598] sm:$0xff] %v1616
        %3118 = vst [vmem:[%s177 + $0x5a0] sm:$0xff] %v1936
        %3119 = vst [vmem:[%s177 + $0x5a8] sm:$0xff] %v2256
        %3120 = vst [vmem:[%s177 + $0x5b0] sm:$0xff] %v2576
        %3121 = vst [vmem:[%s177 + $0x5b8] sm:$0xff] %v2896
        %3122 = vst [vmem:[%s177 + $0x5c0] sm:$0xff] %v657
        %3123 = vst [vmem:[%s177 + $0x5c8] sm:$0xff] %v977
        %3124 = vst [vmem:[%s177 + $0x5d0] sm:$0xff] %v1297
        %3125 = vst [vmem:[%s177 + $0x5d8] sm:$0xff] %v1617
        %3126 = vst [vmem:[%s177 + $0x5e0] sm:$0xff] %v1937
        %3127 = vst [vmem:[%s177 + $0x5e8] sm:$0xff] %v2257
        %3128 = vst [vmem:[%s177 + $0x5f0] sm:$0xff] %v2577
        %3129 = vst [vmem:[%s177 + $0x5f8] sm:$0xff] %v2897
        %3130 = vst [vmem:[%s177 + $0x600] sm:$0xff] %v658
        %3131 = vst [vmem:[%s177 + $0x608] sm:$0xff] %v978
        %3132 = vst [vmem:[%s177 + $0x610] sm:$0xff] %v1298
        %3133 = vst [vmem:[%s177 + $0x618] sm:$0xff] %v1618
        %3134 = vst [vmem:[%s177 + $0x620] sm:$0xff] %v1938
        %3135 = vst [vmem:[%s177 + $0x628] sm:$0xff] %v2258
        %3136 = vst [vmem:[%s177 + $0x630] sm:$0xff] %v2578
        %3137 = vst [vmem:[%s177 + $0x638] sm:$0xff] %v2898
        %3138 = vst [vmem:[%s177 + $0x640] sm:$0xff] %v659
        %3139 = vst [vmem:[%s177 + $0x648] sm:$0xff] %v979
        %3140 = vst [vmem:[%s177 + $0x650] sm:$0xff] %v1299
        %3141 = vst [vmem:[%s177 + $0x658] sm:$0xff] %v1619
        %3142 = vst [vmem:[%s177 + $0x660] sm:$0xff] %v1939
        %3143 = vst [vmem:[%s177 + $0x668] sm:$0xff] %v2259
        %3144 = vst [vmem:[%s177 + $0x670] sm:$0xff] %v2579
        %3145 = vst [vmem:[%s177 + $0x678] sm:$0xff] %v2899
        %3146 = vst [vmem:[%s177 + $0x680] sm:$0xff] %v660
        %3147 = vst [vmem:[%s177 + $0x688] sm:$0xff] %v980
        %3148 = vst [vmem:[%s177 + $0x690] sm:$0xff] %v1300
        %3149 = vst [vmem:[%s177 + $0x698] sm:$0xff] %v1620
        %3150 = vst [vmem:[%s177 + $0x6a0] sm:$0xff] %v1940
        %3151 = vst [vmem:[%s177 + $0x6a8] sm:$0xff] %v2260
        %3152 = vst [vmem:[%s177 + $0x6b0] sm:$0xff] %v2580
        %3153 = vst [vmem:[%s177 + $0x6b8] sm:$0xff] %v2900
        %3154 = vst [vmem:[%s177 + $0x6c0] sm:$0xff] %v661
        %3155 = vst [vmem:[%s177 + $0x6c8] sm:$0xff] %v981
        %3156 = vst [vmem:[%s177 + $0x6d0] sm:$0xff] %v1301
        %3157 = vst [vmem:[%s177 + $0x6d8] sm:$0xff] %v1621
        %3158 = vst [vmem:[%s177 + $0x6e0] sm:$0xff] %v1941
        %3159 = vst [vmem:[%s177 + $0x6e8] sm:$0xff] %v2261
        %3160 = vst [vmem:[%s177 + $0x6f0] sm:$0xff] %v2581
        %3161 = vst [vmem:[%s177 + $0x6f8] sm:$0xff] %v2901
        %3162 = vst [vmem:[%s177 + $0x700] sm:$0xff] %v662
        %3163 = vst [vmem:[%s177 + $0x708] sm:$0xff] %v982
        %3164 = vst [vmem:[%s177 + $0x710] sm:$0xff] %v1302
        %3165 = vst [vmem:[%s177 + $0x718] sm:$0xff] %v1622
        %3166 = vst [vmem:[%s177 + $0x720] sm:$0xff] %v1942
        %3167 = vst [vmem:[%s177 + $0x728] sm:$0xff] %v2262
        %3168 = vst [vmem:[%s177 + $0x730] sm:$0xff] %v2582
        %3169 = vst [vmem:[%s177 + $0x738] sm:$0xff] %v2902
        %3170 = vst [vmem:[%s177 + $0x740] sm:$0xff] %v663
        %3171 = vst [vmem:[%s177 + $0x748] sm:$0xff] %v983
        %3172 = vst [vmem:[%s177 + $0x750] sm:$0xff] %v1303
        %3173 = vst [vmem:[%s177 + $0x758] sm:$0xff] %v1623
        %3174 = vst [vmem:[%s177 + $0x760] sm:$0xff] %v1943
        %3175 = vst [vmem:[%s177 + $0x768] sm:$0xff] %v2263
        %3176 = vst [vmem:[%s177 + $0x770] sm:$0xff] %v2583
        %3177 = vst [vmem:[%s177 + $0x778] sm:$0xff] %v2903
        %3178 = vst [vmem:[%s177 + $0x780] sm:$0xff] %v664
        %3179 = vst [vmem:[%s177 + $0x788] sm:$0xff] %v984
        %3180 = vst [vmem:[%s177 + $0x790] sm:$0xff] %v1304
        %3181 = vst [vmem:[%s177 + $0x798] sm:$0xff] %v1624
        %3182 = vst [vmem:[%s177 + $0x7a0] sm:$0xff] %v1944
        %3183 = vst [vmem:[%s177 + $0x7a8] sm:$0xff] %v2264
        %3184 = vst [vmem:[%s177 + $0x7b0] sm:$0xff] %v2584
        %3185 = vst [vmem:[%s177 + $0x7b8] sm:$0xff] %v2904
        %3186 = vst [vmem:[%s177 + $0x7c0] sm:$0xff] %v665
        %3187 = vst [vmem:[%s177 + $0x7c8] sm:$0xff] %v985
        %3188 = vst [vmem:[%s177 + $0x7d0] sm:$0xff] %v1305
        %3189 = vst [vmem:[%s177 + $0x7d8] sm:$0xff] %v1625
        %3190 = vst [vmem:[%s177 + $0x7e0] sm:$0xff] %v1945
        %3191 = vst [vmem:[%s177 + $0x7e8] sm:$0xff] %v2265
        %3192 = vst [vmem:[%s177 + $0x7f0] sm:$0xff] %v2585
        %3193 = vst [vmem:[%s177 + $0x7f8] sm:$0xff] %v2905
        %3194 = vst [vmem:[%s177 + $0x800] sm:$0xff] %v666
        %3195 = vst [vmem:[%s177 + $0x808] sm:$0xff] %v986
        %3196 = vst [vmem:[%s177 + $0x810] sm:$0xff] %v1306
        %3197 = vst [vmem:[%s177 + $0x818] sm:$0xff] %v1626
        %3198 = vst [vmem:[%s177 + $0x820] sm:$0xff] %v1946
        %3199 = vst [vmem:[%s177 + $0x828] sm:$0xff] %v2266
        %3200 = vst [vmem:[%s177 + $0x830] sm:$0xff] %v2586
        %3201 = vst [vmem:[%s177 + $0x838] sm:$0xff] %v2906
        %3202 = vst [vmem:[%s177 + $0x840] sm:$0xff] %v667
        %3203 = vst [vmem:[%s177 + $0x848] sm:$0xff] %v987
        %3204 = vst [vmem:[%s177 + $0x850] sm:$0xff] %v1307
        %3205 = vst [vmem:[%s177 + $0x858] sm:$0xff] %v1627
        %3206 = vst [vmem:[%s177 + $0x860] sm:$0xff] %v1947
        %3207 = vst [vmem:[%s177 + $0x868] sm:$0xff] %v2267
        %3208 = vst [vmem:[%s177 + $0x870] sm:$0xff] %v2587
        %3209 = vst [vmem:[%s177 + $0x878] sm:$0xff] %v2907
        %3210 = vst [vmem:[%s177 + $0x880] sm:$0xff] %v668
        %3211 = vst [vmem:[%s177 + $0x888] sm:$0xff] %v988
        %3212 = vst [vmem:[%s177 + $0x890] sm:$0xff] %v1308
        %3213 = vst [vmem:[%s177 + $0x898] sm:$0xff] %v1628
        %3214 = vst [vmem:[%s177 + $0x8a0] sm:$0xff] %v1948
        %3215 = vst [vmem:[%s177 + $0x8a8] sm:$0xff] %v2268
        %3216 = vst [vmem:[%s177 + $0x8b0] sm:$0xff] %v2588
        %3217 = vst [vmem:[%s177 + $0x8b8] sm:$0xff] %v2908
        %3218 = vst [vmem:[%s177 + $0x8c0] sm:$0xff] %v669
        %3219 = vst [vmem:[%s177 + $0x8c8] sm:$0xff] %v989
        %3220 = vst [vmem:[%s177 + $0x8d0] sm:$0xff] %v1309
        %3221 = vst [vmem:[%s177 + $0x8d8] sm:$0xff] %v1629
        %3222 = vst [vmem:[%s177 + $0x8e0] sm:$0xff] %v1949
        %3223 = vst [vmem:[%s177 + $0x8e8] sm:$0xff] %v2269
        %3224 = vst [vmem:[%s177 + $0x8f0] sm:$0xff] %v2589
        %3225 = vst [vmem:[%s177 + $0x8f8] sm:$0xff] %v2909
        %3226 = vst [vmem:[%s177 + $0x900] sm:$0xff] %v670
        %3227 = vst [vmem:[%s177 + $0x908] sm:$0xff] %v990
        %3228 = vst [vmem:[%s177 + $0x910] sm:$0xff] %v1310
        %3229 = vst [vmem:[%s177 + $0x918] sm:$0xff] %v1630
        %3230 = vst [vmem:[%s177 + $0x920] sm:$0xff] %v1950
        %3231 = vst [vmem:[%s177 + $0x928] sm:$0xff] %v2270
        %3232 = vst [vmem:[%s177 + $0x930] sm:$0xff] %v2590
        %3233 = vst [vmem:[%s177 + $0x938] sm:$0xff] %v2910
        %3234 = vst [vmem:[%s177 + $0x940] sm:$0xff] %v671
        %3235 = vst [vmem:[%s177 + $0x948] sm:$0xff] %v991
        %3236 = vst [vmem:[%s177 + $0x950] sm:$0xff] %v1311
        %3237 = vst [vmem:[%s177 + $0x958] sm:$0xff] %v1631
        %3238 = vst [vmem:[%s177 + $0x960] sm:$0xff] %v1951
        %3239 = vst [vmem:[%s177 + $0x968] sm:$0xff] %v2271
        %3240 = vst [vmem:[%s177 + $0x970] sm:$0xff] %v2591
        %3241 = vst [vmem:[%s177 + $0x978] sm:$0xff] %v2911
        %3242 = vst [vmem:[%s177 + $0x980] sm:$0xff] %v672
        %3243 = vst [vmem:[%s177 + $0x988] sm:$0xff] %v992
        %3244 = vst [vmem:[%s177 + $0x990] sm:$0xff] %v1312
        %3245 = vst [vmem:[%s177 + $0x998] sm:$0xff] %v1632
        %3246 = vst [vmem:[%s177 + $0x9a0] sm:$0xff] %v1952
        %3247 = vst [vmem:[%s177 + $0x9a8] sm:$0xff] %v2272
        %3248 = vst [vmem:[%s177 + $0x9b0] sm:$0xff] %v2592
        %3249 = vst [vmem:[%s177 + $0x9b8] sm:$0xff] %v2912
        %3250 = vst [vmem:[%s177 + $0x9c0] sm:$0xff] %v673
        %3251 = vst [vmem:[%s177 + $0x9c8] sm:$0xff] %v993
        %3252 = vst [vmem:[%s177 + $0x9d0] sm:$0xff] %v1313
        %3253 = vst [vmem:[%s177 + $0x9d8] sm:$0xff] %v1633
        %3254 = vst [vmem:[%s177 + $0x9e0] sm:$0xff] %v1953
        %3255 = vst [vmem:[%s177 + $0x9e8] sm:$0xff] %v2273
        %3256 = vst [vmem:[%s177 + $0x9f0] sm:$0xff] %v2593
        %3257 = vst [vmem:[%s177 + $0x9f8] sm:$0xff] %v2913
        %3258 = vst [vmem:[%s177 + $0xa00] sm:$0xff] %v674
        %3259 = vst [vmem:[%s177 + $0xa08] sm:$0xff] %v994
        %3260 = vst [vmem:[%s177 + $0xa10] sm:$0xff] %v1314
        %3261 = vst [vmem:[%s177 + $0xa18] sm:$0xff] %v1634
        %3262 = vst [vmem:[%s177 + $0xa20] sm:$0xff] %v1954
        %3263 = vst [vmem:[%s177 + $0xa28] sm:$0xff] %v2274
        %3264 = vst [vmem:[%s177 + $0xa30] sm:$0xff] %v2594
        %3265 = vst [vmem:[%s177 + $0xa38] sm:$0xff] %v2914
        %3266 = vst [vmem:[%s177 + $0xa40] sm:$0xff] %v675
        %3267 = vst [vmem:[%s177 + $0xa48] sm:$0xff] %v995
        %3268 = vst [vmem:[%s177 + $0xa50] sm:$0xff] %v1315
        %3269 = vst [vmem:[%s177 + $0xa58] sm:$0xff] %v1635
        %3270 = vst [vmem:[%s177 + $0xa60] sm:$0xff] %v1955
        %3271 = vst [vmem:[%s177 + $0xa68] sm:$0xff] %v2275
        %3272 = vst [vmem:[%s177 + $0xa70] sm:$0xff] %v2595
        %3273 = vst [vmem:[%s177 + $0xa78] sm:$0xff] %v2915
        %3274 = vst [vmem:[%s177 + $0xa80] sm:$0xff] %v676
        %3275 = vst [vmem:[%s177 + $0xa88] sm:$0xff] %v996
        %3276 = vst [vmem:[%s177 + $0xa90] sm:$0xff] %v1316
        %3277 = vst [vmem:[%s177 + $0xa98] sm:$0xff] %v1636
        %3278 = vst [vmem:[%s177 + $0xaa0] sm:$0xff] %v1956
        %3279 = vst [vmem:[%s177 + $0xaa8] sm:$0xff] %v2276
        %3280 = vst [vmem:[%s177 + $0xab0] sm:$0xff] %v2596
        %3281 = vst [vmem:[%s177 + $0xab8] sm:$0xff] %v2916
        %3282 = vst [vmem:[%s177 + $0xac0] sm:$0xff] %v677
        %3283 = vst [vmem:[%s177 + $0xac8] sm:$0xff] %v997
        %3284 = vst [vmem:[%s177 + $0xad0] sm:$0xff] %v1317
        %3285 = vst [vmem:[%s177 + $0xad8] sm:$0xff] %v1637
        %3286 = vst [vmem:[%s177 + $0xae0] sm:$0xff] %v1957
        %3287 = vst [vmem:[%s177 + $0xae8] sm:$0xff] %v2277
        %3288 = vst [vmem:[%s177 + $0xaf0] sm:$0xff] %v2597
        %3289 = vst [vmem:[%s177 + $0xaf8] sm:$0xff] %v2917
        %3290 = vst [vmem:[%s177 + $0xb00] sm:$0xff] %v678
        %3291 = vst [vmem:[%s177 + $0xb08] sm:$0xff] %v998
        %3292 = vst [vmem:[%s177 + $0xb10] sm:$0xff] %v1318
        %3293 = vst [vmem:[%s177 + $0xb18] sm:$0xff] %v1638
        %3294 = vst [vmem:[%s177 + $0xb20] sm:$0xff] %v1958
        %3295 = vst [vmem:[%s177 + $0xb28] sm:$0xff] %v2278
        %3296 = vst [vmem:[%s177 + $0xb30] sm:$0xff] %v2598
        %3297 = vst [vmem:[%s177 + $0xb38] sm:$0xff] %v2918
        %3298 = vst [vmem:[%s177 + $0xb40] sm:$0xff] %v679
        %3299 = vst [vmem:[%s177 + $0xb48] sm:$0xff] %v999
        %3300 = vst [vmem:[%s177 + $0xb50] sm:$0xff] %v1319
        %3301 = vst [vmem:[%s177 + $0xb58] sm:$0xff] %v1639
        %3302 = vst [vmem:[%s177 + $0xb60] sm:$0xff] %v1959
        %3303 = vst [vmem:[%s177 + $0xb68] sm:$0xff] %v2279
        %3304 = vst [vmem:[%s177 + $0xb70] sm:$0xff] %v2599
        %3305 = vst [vmem:[%s177 + $0xb78] sm:$0xff] %v2919
        %3306 = vst [vmem:[%s177 + $0xb80] sm:$0xff] %v680
        %3307 = vst [vmem:[%s177 + $0xb88] sm:$0xff] %v1000
        %3308 = vst [vmem:[%s177 + $0xb90] sm:$0xff] %v1320
        %3309 = vst [vmem:[%s177 + $0xb98] sm:$0xff] %v1640
        %3310 = vst [vmem:[%s177 + $0xba0] sm:$0xff] %v1960
        %3311 = vst [vmem:[%s177 + $0xba8] sm:$0xff] %v2280
        %3312 = vst [vmem:[%s177 + $0xbb0] sm:$0xff] %v2600
        %3313 = vst [vmem:[%s177 + $0xbb8] sm:$0xff] %v2920
        %3314 = vst [vmem:[%s177 + $0xbc0] sm:$0xff] %v681
        %3315 = vst [vmem:[%s177 + $0xbc8] sm:$0xff] %v1001
        %3316 = vst [vmem:[%s177 + $0xbd0] sm:$0xff] %v1321
        %3317 = vst [vmem:[%s177 + $0xbd8] sm:$0xff] %v1641
        %3318 = vst [vmem:[%s177 + $0xbe0] sm:$0xff] %v1961
        %3319 = vst [vmem:[%s177 + $0xbe8] sm:$0xff] %v2281
        %3320 = vst [vmem:[%s177 + $0xbf0] sm:$0xff] %v2601
        %3321 = vst [vmem:[%s177 + $0xbf8] sm:$0xff] %v2921
        %3322 = vst [vmem:[%s177 + $0xc00] sm:$0xff] %v682
        %3323 = vst [vmem:[%s177 + $0xc08] sm:$0xff] %v1002
        %3324 = vst [vmem:[%s177 + $0xc10] sm:$0xff] %v1322
        %3325 = vst [vmem:[%s177 + $0xc18] sm:$0xff] %v1642
        %3326 = vst [vmem:[%s177 + $0xc20] sm:$0xff] %v1962
        %3327 = vst [vmem:[%s177 + $0xc28] sm:$0xff] %v2282
        %3328 = vst [vmem:[%s177 + $0xc30] sm:$0xff] %v2602
        %3329 = vst [vmem:[%s177 + $0xc38] sm:$0xff] %v2922
        %3330 = vst [vmem:[%s177 + $0xc40] sm:$0xff] %v683
        %3331 = vst [vmem:[%s177 + $0xc48] sm:$0xff] %v1003
        %3332 = vst [vmem:[%s177 + $0xc50] sm:$0xff] %v1323
        %3333 = vst [vmem:[%s177 + $0xc58] sm:$0xff] %v1643
        %3334 = vst [vmem:[%s177 + $0xc60] sm:$0xff] %v1963
        %3335 = vst [vmem:[%s177 + $0xc68] sm:$0xff] %v2283
        %3336 = vst [vmem:[%s177 + $0xc70] sm:$0xff] %v2603
        %3337 = vst [vmem:[%s177 + $0xc78] sm:$0xff] %v2923
        %3338 = vst [vmem:[%s177 + $0xc80] sm:$0xff] %v684
        %3339 = vst [vmem:[%s177 + $0xc88] sm:$0xff] %v1004
        %3340 = vst [vmem:[%s177 + $0xc90] sm:$0xff] %v1324
        %3341 = vst [vmem:[%s177 + $0xc98] sm:$0xff] %v1644
        %3342 = vst [vmem:[%s177 + $0xca0] sm:$0xff] %v1964
        %3343 = vst [vmem:[%s177 + $0xca8] sm:$0xff] %v2284
        %3344 = vst [vmem:[%s177 + $0xcb0] sm:$0xff] %v2604
        %3345 = vst [vmem:[%s177 + $0xcb8] sm:$0xff] %v2924
        %3346 = vst [vmem:[%s177 + $0xcc0] sm:$0xff] %v685
        %3347 = vst [vmem:[%s177 + $0xcc8] sm:$0xff] %v1005
        %3348 = vst [vmem:[%s177 + $0xcd0] sm:$0xff] %v1325
        %3349 = vst [vmem:[%s177 + $0xcd8] sm:$0xff] %v1645
        %3350 = vst [vmem:[%s177 + $0xce0] sm:$0xff] %v1965
        %3351 = vst [vmem:[%s177 + $0xce8] sm:$0xff] %v2285
        %3352 = vst [vmem:[%s177 + $0xcf0] sm:$0xff] %v2605
        %3353 = vst [vmem:[%s177 + $0xcf8] sm:$0xff] %v2925
        %3354 = vst [vmem:[%s177 + $0xd00] sm:$0xff] %v686
        %3355 = vst [vmem:[%s177 + $0xd08] sm:$0xff] %v1006
        %3356 = vst [vmem:[%s177 + $0xd10] sm:$0xff] %v1326
        %3357 = vst [vmem:[%s177 + $0xd18] sm:$0xff] %v1646
        %3358 = vst [vmem:[%s177 + $0xd20] sm:$0xff] %v1966
        %3359 = vst [vmem:[%s177 + $0xd28] sm:$0xff] %v2286
        %3360 = vst [vmem:[%s177 + $0xd30] sm:$0xff] %v2606
        %3361 = vst [vmem:[%s177 + $0xd38] sm:$0xff] %v2926
        %3362 = vst [vmem:[%s177 + $0xd40] sm:$0xff] %v687
        %3363 = vst [vmem:[%s177 + $0xd48] sm:$0xff] %v1007
        %3364 = vst [vmem:[%s177 + $0xd50] sm:$0xff] %v1327
        %3365 = vst [vmem:[%s177 + $0xd58] sm:$0xff] %v1647
        %3366 = vst [vmem:[%s177 + $0xd60] sm:$0xff] %v1967
        %3367 = vst [vmem:[%s177 + $0xd68] sm:$0xff] %v2287
        %3368 = vst [vmem:[%s177 + $0xd70] sm:$0xff] %v2607
        %3369 = vst [vmem:[%s177 + $0xd78] sm:$0xff] %v2927
        %3370 = vst [vmem:[%s177 + $0xd80] sm:$0xff] %v688
        %3371 = vst [vmem:[%s177 + $0xd88] sm:$0xff] %v1008
        %3372 = vst [vmem:[%s177 + $0xd90] sm:$0xff] %v1328
        %3373 = vst [vmem:[%s177 + $0xd98] sm:$0xff] %v1648
        %3374 = vst [vmem:[%s177 + $0xda0] sm:$0xff] %v1968
        %3375 = vst [vmem:[%s177 + $0xda8] sm:$0xff] %v2288
        %3376 = vst [vmem:[%s177 + $0xdb0] sm:$0xff] %v2608
        %3377 = vst [vmem:[%s177 + $0xdb8] sm:$0xff] %v2928
        %3378 = vst [vmem:[%s177 + $0xdc0] sm:$0xff] %v689
        %3379 = vst [vmem:[%s177 + $0xdc8] sm:$0xff] %v1009
        %3380 = vst [vmem:[%s177 + $0xdd0] sm:$0xff] %v1329
        %3381 = vst [vmem:[%s177 + $0xdd8] sm:$0xff] %v1649
        %3382 = vst [vmem:[%s177 + $0xde0] sm:$0xff] %v1969
        %3383 = vst [vmem:[%s177 + $0xde8] sm:$0xff] %v2289
        %3384 = vst [vmem:[%s177 + $0xdf0] sm:$0xff] %v2609
        %3385 = vst [vmem:[%s177 + $0xdf8] sm:$0xff] %v2929
        %3386 = vst [vmem:[%s177 + $0xe00] sm:$0xff] %v690
        %3387 = vst [vmem:[%s177 + $0xe08] sm:$0xff] %v1010
        %3388 = vst [vmem:[%s177 + $0xe10] sm:$0xff] %v1330
        %3389 = vst [vmem:[%s177 + $0xe18] sm:$0xff] %v1650
        %3390 = vst [vmem:[%s177 + $0xe20] sm:$0xff] %v1970
        %3391 = vst [vmem:[%s177 + $0xe28] sm:$0xff] %v2290
        %3392 = vst [vmem:[%s177 + $0xe30] sm:$0xff] %v2610
        %3393 = vst [vmem:[%s177 + $0xe38] sm:$0xff] %v2930
        %3394 = vst [vmem:[%s177 + $0xe40] sm:$0xff] %v691
        %3395 = vst [vmem:[%s177 + $0xe48] sm:$0xff] %v1011
        %3396 = vst [vmem:[%s177 + $0xe50] sm:$0xff] %v1331
        %3397 = vst [vmem:[%s177 + $0xe58] sm:$0xff] %v1651
        %3398 = vst [vmem:[%s177 + $0xe60] sm:$0xff] %v1971
        %3399 = vst [vmem:[%s177 + $0xe68] sm:$0xff] %v2291
        %3400 = vst [vmem:[%s177 + $0xe70] sm:$0xff] %v2611
        %3401 = vst [vmem:[%s177 + $0xe78] sm:$0xff] %v2931
        %3402 = vst [vmem:[%s177 + $0xe80] sm:$0xff] %v692
        %3403 = vst [vmem:[%s177 + $0xe88] sm:$0xff] %v1012
        %3404 = vst [vmem:[%s177 + $0xe90] sm:$0xff] %v1332
        %3405 = vst [vmem:[%s177 + $0xe98] sm:$0xff] %v1652
        %3406 = vst [vmem:[%s177 + $0xea0] sm:$0xff] %v1972
        %3407 = vst [vmem:[%s177 + $0xea8] sm:$0xff] %v2292
        %3408 = vst [vmem:[%s177 + $0xeb0] sm:$0xff] %v2612
        %3409 = vst [vmem:[%s177 + $0xeb8] sm:$0xff] %v2932
        %3410 = vst [vmem:[%s177 + $0xec0] sm:$0xff] %v693
        %3411 = vst [vmem:[%s177 + $0xec8] sm:$0xff] %v1013
        %3412 = vst [vmem:[%s177 + $0xed0] sm:$0xff] %v1333
        %3413 = vst [vmem:[%s177 + $0xed8] sm:$0xff] %v1653
        %3414 = vst [vmem:[%s177 + $0xee0] sm:$0xff] %v1973
        %3415 = vst [vmem:[%s177 + $0xee8] sm:$0xff] %v2293
        %3416 = vst [vmem:[%s177 + $0xef0] sm:$0xff] %v2613
        %3417 = vst [vmem:[%s177 + $0xef8] sm:$0xff] %v2933
        %3418 = vst [vmem:[%s177 + $0xf00] sm:$0xff] %v694
        %3419 = vst [vmem:[%s177 + $0xf08] sm:$0xff] %v1014
        %3420 = vst [vmem:[%s177 + $0xf10] sm:$0xff] %v1334
        %3421 = vst [vmem:[%s177 + $0xf18] sm:$0xff] %v1654
        %3422 = vst [vmem:[%s177 + $0xf20] sm:$0xff] %v1974
        %3423 = vst [vmem:[%s177 + $0xf28] sm:$0xff] %v2294
        %3424 = vst [vmem:[%s177 + $0xf30] sm:$0xff] %v2614
        %3425 = vst [vmem:[%s177 + $0xf38] sm:$0xff] %v2934
        %3426 = vst [vmem:[%s177 + $0xf40] sm:$0xff] %v695
        %3427 = vst [vmem:[%s177 + $0xf48] sm:$0xff] %v1015
        %3428 = vst [vmem:[%s177 + $0xf50] sm:$0xff] %v1335
        %3429 = vst [vmem:[%s177 + $0xf58] sm:$0xff] %v1655
        %3430 = vst [vmem:[%s177 + $0xf60] sm:$0xff] %v1975
        %3431 = vst [vmem:[%s177 + $0xf68] sm:$0xff] %v2295
        %3432 = vst [vmem:[%s177 + $0xf70] sm:$0xff] %v2615
        %3433 = vst [vmem:[%s177 + $0xf78] sm:$0xff] %v2935
        %3434 = vst [vmem:[%s177 + $0xf80] sm:$0xff] %v696
        %3435 = vst [vmem:[%s177 + $0xf88] sm:$0xff] %v1016
        %3436 = vst [vmem:[%s177 + $0xf90] sm:$0xff] %v1336
        %3437 = vst [vmem:[%s177 + $0xf98] sm:$0xff] %v1656
        %3438 = vst [vmem:[%s177 + $0xfa0] sm:$0xff] %v1976
        %3439 = vst [vmem:[%s177 + $0xfa8] sm:$0xff] %v2296
        %3440 = vst [vmem:[%s177 + $0xfb0] sm:$0xff] %v2616
        %3441 = vst [vmem:[%s177 + $0xfb8] sm:$0xff] %v2936
        %3442 = vst [vmem:[%s177 + $0xfc0] sm:$0xff] %v697
        %3443 = vst [vmem:[%s177 + $0xfc8] sm:$0xff] %v1017
        %3444 = vst [vmem:[%s177 + $0xfd0] sm:$0xff] %v1337
        %3445 = vst [vmem:[%s177 + $0xfd8] sm:$0xff] %v1657
        %3446 = vst [vmem:[%s177 + $0xfe0] sm:$0xff] %v1977
        %3447 = vst [vmem:[%s177 + $0xfe8] sm:$0xff] %v2297
        %3448 = vst [vmem:[%s177 + $0xff0] sm:$0xff] %v2617
        %3449 = vst [vmem:[%s177 + $0xff8] sm:$0xff] %v2937
        %s3450 = sand.u32 %s79, 1
        %s3451 = scalar_lea.sflag [#allocation4], %s3450
        %s3452 = sand.u32 %s79, 1
        %s3453 = smul.addr %s3452, 4096
        %s3454 = scalar_lea.vmem [#allocation5], %s3453
        // Predicated region
        $region33: #{tpu_custom_call.1} parent=27 // pred_check
          %p3455 = pneg %p89
        $region34: #{tpu_custom_call.1} parent=27 // pred_check_branch
          %3457 = sbr.rel (%p3455) target = $region36
        $region35: #{tpu_custom_call.1} parent=27 // pred_region
          %s3458 = smul.u32 64, %s19
          %s3460 = ssub.s32 65536, 65536
          %3461 = vsyncadd %s3451, %s3460
          %s3462 = smul.addr %s3458, 8
          %s3463 = smul.addr %s3462, 128
          %s3464 = scalar_lea.hbm %s2, %s3463
          %s3465 = sshll.u32 %s3454, 4
          %s3466 = int_to_ptr.vmem [resolvable:$true] %s3465
          %3471 = dma.vmem_to_hbm [thread:$0]  %s3466, 65536, %s3464, %s3451, 1024, 1024, 64
        $region36: #{tpu_custom_call.1} parent=27 // pred_fallthru
          _
      $region28: #{tpu_custom_call.1} parent=5 // pred_fallthru
        _
      %p3472 = scmp.le.s32.totalorder 2, %s14
      // Predicated region
      $region37: #{tpu_custom_call.1} parent=5 // pred_check
        %p3473 = pneg %p3472
      $region38: #{tpu_custom_call.1} parent=5 // pred_check_branch
        %3475 = sbr.rel (%p3473) target = $region40
      $region39: #{tpu_custom_call.1} parent=5 // pred_region
        %s3476 = ssub.s32 %s14, 2
        // Predicated region
        $region41: #{tpu_custom_call.1} parent=39 // pred_check
          %p3477 = pneg %p95
        $region42: #{tpu_custom_call.1} parent=39 // pred_check_branch
          %3479 = sbr.rel (%p3477) target = $region44
        $region43: #{tpu_custom_call.1} parent=39 // pred_region
          %s3480 = sand.u32 %s80, 1
          %s3481 = scalar_lea.sflag [#allocation4], %s3480
          %s3482 = sand.u32 %s80, 1
          %s3483 = smul.addr %s3482, 4096
          %s3484 = scalar_lea.vmem [#allocation5], %s3483
          %3485 = dma.done %s3481, 65536
        $region44: #{tpu_custom_call.1} parent=39 // pred_fallthru
          _
      $region40: #{tpu_custom_call.1} parent=5 // pred_fallthru
        _
    $region6: #{tpu_custom_call.1} parent=1 // loop_footer
      %s18 = sadd.s32 1, %s14
    $region7: #{tpu_custom_call.1} parent=1 // loop_footer_branch
      %13 = sbr.rel target = $region3
    $region8: #{tpu_custom_call.1} parent=1 // loop_exit
      _
    %3486 = vsyncpa [#allocation3], 1
    %s3487 = scalar_lea.sflag [#allocation3], 1
    %3488 = vsyncpa %s3487, 1
    %3489 = vsyncpa [#allocation4], 1
    %s3490 = scalar_lea.sflag [#allocation4], 1
    %3491 = vsyncpa %s3490, 1

</llo_original>
